<compile_context>
chip_gen: v7x
topology: tpu7x:2x2x1
jax: 0.10.0
libtpu: 0.0.40
codegen_flags: <defaults>
</compile_context>

<pallas_src>
import math

import jax
import jax.numpy as jnp
import numpy as np
from jax import lax
from jax.experimental import pallas as pl
from jax.experimental.pallas import tpu as pltpu

# ---- problem sizes (small, consistent with the module) ----
B = 2            # batch
L = 8            # sequence length
D_M = 32         # model dim
HEAD = 4         # number of heads
D_K = D_M // HEAD
BL = B * L       # fused row count
EPS = 1e-6
NEG_INF = -1000000000.0


# ----------------------------- Pallas kernel -----------------------------
def msa_kernel(x_ref, mask_ref,
               wqkv_ref, bqkv_ref, wo_ref, bo_ref,
               w5_ref, b5_ref, w4_ref, b4_ref,
               ln_a_ref, ln_b_ref,
               out_ref):
    x = x_ref[...]                       # (BL, D_M) f32
    m = mask_ref[...]                    # (BL, BL)  f32 block-diagonal 0/1

    # Fused Q|K|V projection: one MXU matmul (bf16 operands, f32 accumulation).
    qkv = jnp.dot(x.astype(jnp.bfloat16), wqkv_ref[...],
                  preferred_element_type=jnp.float32) + bqkv_ref[...]   # (BL, 3*D_M)

    # Mask hoisted out of the head loop: additive (-1e9) + multiplicative (0/1).
    mask_add = (1.0 - m) * NEG_INF
    scale = 1.0 / math.sqrt(D_K)

    o = jnp.zeros((BL, D_M), jnp.float32)
    for h in range(HEAD):                # static loop over 4 heads
        qh = qkv[:, h * D_K:(h + 1) * D_K]                         # (BL, D_K)
        kh = qkv[:, D_M + h * D_K:D_M + (h + 1) * D_K]
        vh = qkv[:, 2 * D_M + h * D_K:2 * D_M + (h + 1) * D_K]
        # Scores for BOTH batches at once; the block-diagonal mask keeps the
        # batches from mixing (cross-batch entries -> -1e9 -> exp == 0 exactly).
        s = lax.dot_general(qh, kh, (((1,), (1,)), ((), ())),
                            preferred_element_type=jnp.float32) * scale + mask_add
        s_max = jnp.max(s, axis=-1, keepdims=True)
        e = jnp.exp(s - s_max)
        att = e * pl.reciprocal(jnp.sum(e, axis=-1, keepdims=True), approx=True)
        att = att * m                                              # att_fixed
        # att_dropout: identity in eval mode
        pv = jnp.dot(att, vh, preferred_element_type=jnp.float32)  # (BL, D_K)
        # Output projection folded per head (removes the lane-axis concat):
        #   concat_h(pv_h) @ Wo == sum_h pv_h @ Wo[h*D_K:(h+1)*D_K, :]
        o = o + jnp.dot(pv.astype(jnp.bfloat16), wo_ref[h],
                        preferred_element_type=jnp.float32)
    o = o + bo_ref[...]                                            # QKVs[3] bias

    # Shared LayerNorm (torch unbiased std, (std + eps) denominator).
    ln_a = jnp.broadcast_to(ln_a_ref[...], (BL, D_M))              # hoisted (traced 3x)
    ln_b = jnp.broadcast_to(ln_b_ref[...], (BL, D_M))
    inv_nm1 = 1.0 / (D_M - 1)

    def layer_norm(t):
        mean = jnp.mean(t, axis=-1, keepdims=True)
        d = t - mean
        std = jnp.sqrt(jnp.sum(d * d, axis=-1, keepdims=True) * inv_nm1)
        return ln_a * d * pl.reciprocal(std + EPS, approx=True) + ln_b

    # dropout layers are identity in eval mode
    feed_1 = x + layer_norm(o)
    h5 = jnp.dot(feed_1.astype(jnp.bfloat16), w5_ref[...],
                 preferred_element_type=jnp.float32) + b5_ref[...]     # QKVs[5]
    h4 = jnp.dot(h5.astype(jnp.bfloat16), w4_ref[...],
                 preferred_element_type=jnp.float32) + b4_ref[...]     # QKVs[4]
    out_ref[...] = layer_norm(feed_1 + layer_norm(h4))


# ------------------------------ wrapper ------------------------------
@jax.jit
def multi_self_att(x, mask_f, params):
    (wq, bq, wk, bk, wv, bv, wo, bo, w5, b5, w4, b4, ln_a, ln_b) = params

    xf = x.reshape(BL, D_M)
    # Block-diagonal (BL, BL) mask: batch b's (L, L) mask sits on the diagonal,
    # zeros elsewhere (-> -1e9 scores -> exp == 0), so one fused attention over
    # all B*L rows never mixes batches.  Pure layout plumbing, done outside.
    eye = jnp.eye(B, dtype=mask_f.dtype)
    mask_block = jnp.einsum("bij,bc->bicj", mask_f, eye).reshape(BL, BL)

    wqkv = jnp.concatenate([wq, wk, wv], axis=1).astype(jnp.bfloat16)   # (D_M, 3*D_M)
    bqkv = jnp.concatenate([bq, bk, bv], axis=1)                        # (1, 3*D_M)
    wo_h = wo.reshape(HEAD, D_K, D_M).astype(jnp.bfloat16)              # per-head rows of Wo
    w5b = w5.astype(jnp.bfloat16)
    w4b = w4.astype(jnp.bfloat16)

    def full(shape):
        n = len(shape)
        return pl.BlockSpec(shape, lambda i: (0,) * n)

    out = pl.pallas_call(
        msa_kernel,
        out_shape=jax.ShapeDtypeStruct((BL, D_M), jnp.float32),
        grid=(1,),                      # single invocation: no per-step pipeline overhead
        in_specs=[
            full((BL, D_M)),            # x (flattened)
            full((BL, BL)),             # block-diagonal mask
            full((D_M, 3 * D_M)),       # Wqkv (bf16)
            full((1, 3 * D_M)),         # bqkv
            full((HEAD, D_K, D_M)),     # Wo split per head (bf16)
            full((1, D_M)),             # bo
            full((D_M, D_M)),           # W5 (bf16)
            full((1, D_M)),             # b5
            full((D_M, D_M)),           # W4 (bf16)
            full((1, D_M)),             # b4
            full((1, D_M)),             # ln_a
            full((1, D_M)),             # ln_b
        ],
        out_specs=full((BL, D_M)),
        compiler_params=pltpu.CompilerParams(
            dimension_semantics=("arbitrary",)),
    )(xf, mask_block, wqkv, bqkv, wo_h, bo, w5b, b5, w4b, b4, ln_a, ln_b)

    return out.reshape(B, L, D_M)


# ------------------------- pure-JAX reference -------------------------
def reference(x, mask_f, params):
    (wq, bq, wk, bk, wv, bv, wo, bo, w5, b5, w4, b4, ln_a, ln_b) = params
    lin = lambda v, w, b: v @ w + b[0]

    q = lin(x, wq, bq).reshape(B, L, HEAD, D_K).transpose(0, 2, 1, 3)
    k = lin(x, wk, bk).reshape(B, L, HEAD, D_K).transpose(0, 2, 1, 3)
    v = lin(x, wv, bv).reshape(B, L, HEAD, D_K).transpose(0, 2, 1, 3)

    qk = jnp.einsum("bhqd,bhkd->bhqk", q, k) / math.sqrt(D_K)
    m = mask_f[:, None, :, :]                                  # (B,1,L,L)
    qk = jnp.where(m > 0.5, qk, NEG_INF)
    att = jax.nn.softmax(qk, axis=-1)
    att = m * att
    out = jnp.einsum("bhqk,bhkd->bhqd", att, v)
    out = out.transpose(0, 2, 1, 3).reshape(B, L, D_M)
    out = lin(out, wo, bo)

    def layer_norm(t):
        mean = jnp.mean(t, axis=-1, keepdims=True)
        var = jnp.sum((t - mean) ** 2, axis=-1, keepdims=True) / (D_M - 1)
        std = jnp.sqrt(var)
        return ln_a[0] * (t - mean) / (std + EPS) + ln_b[0]

    feed_1 = x + layer_norm(out)
    hmid = lin(lin(feed_1, w5, b5), w4, b4)
    feed_2 = layer_norm(feed_1 + layer_norm(hmid))
    return feed_2


# ------------------------------- main -------------------------------
if __name__ == "__main__":
    key = jax.random.PRNGKey(0)
    keys = jax.random.split(key, 16)

    def w_init(k):
        return jax.random.normal(k, (D_M, D_M), jnp.float32) * 0.1

    def b_init(k):
        return jax.random.normal(k, (1, D_M), jnp.float32) * 0.01

    wq, bq = w_init(keys[0]), b_init(keys[1])
    wk, bk = w_init(keys[2]), b_init(keys[3])
    wv, bv = w_init(keys[4]), b_init(keys[5])
    wo, bo = w_init(keys[6]), b_init(keys[7])
    w5, b5 = w_init(keys[8]), b_init(keys[9])
    w4, b4 = w_init(keys[10]), b_init(keys[11])
    ln_a = jnp.ones((1, D_M), jnp.float32)
    ln_b = jnp.zeros((1, D_M), jnp.float32)
    params = (wq, bq, wk, bk, wv, bv, wo, bo, w5, b5, w4, b4, ln_a, ln_b)

    x = jax.random.normal(keys[12], (B, L, D_M), jnp.float32)
    # causal boolean mask, same for both batches -> float 0/1, shape (B, L, L)
    mask_bool = jnp.tril(jnp.ones((L, L), jnp.bool_))
    mask_f = jnp.broadcast_to(mask_bool.astype(jnp.float32), (B, L, L))

    out = multi_self_att(x, mask_f, params)
    out = jax.block_until_ready(out)

    ref = reference(x, mask_f, params)
    np.testing.assert_allclose(np.asarray(out), np.asarray(ref),
                               rtol=2e-2, atol=2e-2)

    print("KERNEL_OK")
</pallas_src>

<mosaic_0001>
module attributes {stable_mosaic.version = 11 : i64} {
  func.func @msa_kernel(%arg0: i32, %arg1: memref<16x32xf32, #tpu.memory_space<vmem>>, %arg2: memref<16x16xf32, #tpu.memory_space<vmem>>, %arg3: memref<32x96xbf16, #tpu.memory_space<vmem>>, %arg4: memref<1x96xf32, #tpu.memory_space<vmem>>, %arg5: memref<4x8x32xbf16, #tpu.memory_space<vmem>>, %arg6: memref<1x32xf32, #tpu.memory_space<vmem>>, %arg7: memref<32x32xbf16, #tpu.memory_space<vmem>>, %arg8: memref<1x32xf32, #tpu.memory_space<vmem>>, %arg9: memref<32x32xbf16, #tpu.memory_space<vmem>>, %arg10: memref<1x32xf32, #tpu.memory_space<vmem>>, %arg11: memref<1x32xf32, #tpu.memory_space<vmem>>, %arg12: memref<1x32xf32, #tpu.memory_space<vmem>>, %arg13: memref<16x32xf32, #tpu.memory_space<vmem>>) attributes {dimension_semantics = [#tpu.dimension_semantics<arbitrary>], iteration_bounds = array<i64: 1>, scalar_prefetch = 0 : i64, scratch_operands = 0 : i64, tpu.core_type = #tpu.core_type<tc>, window_params = [{pipeline_mode = #tpu.pipeline_mode<synchronous>, transform_indices = @transform_0, window_bounds = array<i64: 16, 32>}, {pipeline_mode = #tpu.pipeline_mode<synchronous>, transform_indices = @transform_1, window_bounds = array<i64: 16, 16>}, {pipeline_mode = #tpu.pipeline_mode<synchronous>, transform_indices = @transform_2, window_bounds = array<i64: 32, 96>}, {pipeline_mode = #tpu.pipeline_mode<synchronous>, transform_indices = @transform_3, window_bounds = array<i64: 1, 96>}, {pipeline_mode = #tpu.pipeline_mode<synchronous>, transform_indices = @transform_4, window_bounds = array<i64: 4, 8, 32>}, {pipeline_mode = #tpu.pipeline_mode<synchronous>, transform_indices = @transform_5, window_bounds = array<i64: 1, 32>}, {pipeline_mode = #tpu.pipeline_mode<synchronous>, transform_indices = @transform_6, window_bounds = array<i64: 32, 32>}, {pipeline_mode = #tpu.pipeline_mode<synchronous>, transform_indices = @transform_7, window_bounds = array<i64: 1, 32>}, {pipeline_mode = #tpu.pipeline_mode<synchronous>, transform_indices = @transform_8, window_bounds = array<i64: 32, 32>}, {pipeline_mode = #tpu.pipeline_mode<synchronous>, transform_indices = @transform_9, window_bounds = array<i64: 1, 32>}, {pipeline_mode = #tpu.pipeline_mode<synchronous>, transform_indices = @transform_10, window_bounds = array<i64: 1, 32>}, {pipeline_mode = #tpu.pipeline_mode<synchronous>, transform_indices = @transform_11, window_bounds = array<i64: 1, 32>}, {pipeline_mode = #tpu.pipeline_mode<synchronous>, transform_indices = @transform_12, window_bounds = array<i64: 16, 32>}]} {
    %c0 = arith.constant 0 : index
    %c0_0 = arith.constant 0 : index
    %0 = vector.load %arg1[%c0, %c0_0] : memref<16x32xf32, #tpu.memory_space<vmem>>, vector<16x32xf32>
    %c0_1 = arith.constant 0 : index
    %c0_2 = arith.constant 0 : index
    %1 = vector.load %arg2[%c0_1, %c0_2] : memref<16x16xf32, #tpu.memory_space<vmem>>, vector<16x16xf32>
    %2 = arith.truncf %0 : vector<16x32xf32> to vector<16x32xbf16>
    %c0_3 = arith.constant 0 : index
    %c0_4 = arith.constant 0 : index
    %3 = vector.load %arg3[%c0_3, %c0_4] : memref<32x96xbf16, #tpu.memory_space<vmem>>, vector<32x96xbf16>
    %cst = arith.constant dense<0.000000e+00> : vector<16x96xf32>
    %4 = tpu.matmul %2, %3, %cst {dimension_numbers = #tpu.dot_dimension_numbers<[1], [0], [0], [1], [0, 0, 1, 1], [], []>} : vector<16x32xbf16>, vector<32x96xbf16>, vector<16x96xf32> -> vector<16x96xf32>
    %c0_5 = arith.constant 0 : index
    %c0_6 = arith.constant 0 : index
    %5 = vector.load %arg4[%c0_5, %c0_6] : memref<1x96xf32, #tpu.memory_space<vmem>>, vector<1x96xf32>
    %6 = vector.broadcast %5 : vector<1x96xf32> to vector<16x96xf32>
    %7 = arith.addf %4, %6 : vector<16x96xf32>
    %cst_7 = arith.constant 1.000000e+00 : f32
    %8 = vector.broadcast %cst_7 : f32 to vector<16x16xf32>
    %9 = arith.subf %8, %1 : vector<16x16xf32>
    %cst_8 = arith.constant -1.000000e+09 : f32
    %10 = vector.broadcast %cst_8 : f32 to vector<16x16xf32>
    %11 = arith.mulf %9, %10 : vector<16x16xf32>
    %cst_9 = arith.constant 0.000000e+00 : f32
    %12 = vector.broadcast %cst_9 : f32 to vector<16x32xf32>
    %13 = vector.extract_strided_slice %7 {offsets = [0, 0], sizes = [16, 8], strides = [1, 1]} : vector<16x96xf32> to vector<16x8xf32>
    %14 = vector.extract_strided_slice %7 {offsets = [0, 32], sizes = [16, 8], strides = [1, 1]} : vector<16x96xf32> to vector<16x8xf32>
    %15 = vector.extract_strided_slice %7 {offsets = [0, 64], sizes = [16, 8], strides = [1, 1]} : vector<16x96xf32> to vector<16x8xf32>
    %cst_10 = arith.constant dense<0.000000e+00> : vector<16x16xf32>
    %16 = tpu.matmul %13, %14, %cst_10 {dimension_numbers = #tpu.dot_dimension_numbers<[1], [1], [0], [0], [0, 0, 1, 0], [], []>} : vector<16x8xf32>, vector<16x8xf32>, vector<16x16xf32> -> vector<16x16xf32>
    %cst_11 = arith.constant 0.353553385 : f32
    %17 = vector.broadcast %cst_11 : f32 to vector<16x16xf32>
    %18 = arith.mulf %16, %17 : vector<16x16xf32>
    %19 = arith.addf %18, %11 : vector<16x16xf32>
    %cst_12 = arith.constant dense<0xFF800000> : vector<16xf32>
    %20 = vector.multi_reduction <maximumf>, %19, %cst_12 [1] : vector<16x16xf32> to vector<16xf32>
    %21 = vector.shape_cast %20 : vector<16xf32> to vector<16x1xf32>
    %22 = vector.broadcast %21 : vector<16x1xf32> to vector<16x16xf32>
    %23 = arith.subf %19, %22 : vector<16x16xf32>
    %24 = math.exp %23 : vector<16x16xf32>
    %cst_13 = arith.constant dense<0.000000e+00> : vector<16xf32>
    %25 = vector.multi_reduction <add>, %24, %cst_13 [1] : vector<16x16xf32> to vector<16xf32>
    %26 = vector.shape_cast %25 : vector<16xf32> to vector<16x1xf32>
    %27 = tpu.reciprocal %26 {approx = true} : vector<16x1xf32> -> vector<16x1xf32>
    %28 = vector.broadcast %27 : vector<16x1xf32> to vector<16x16xf32>
    %29 = arith.mulf %24, %28 : vector<16x16xf32>
    %30 = arith.mulf %29, %1 : vector<16x16xf32>
    %cst_14 = arith.constant dense<0.000000e+00> : vector<16x8xf32>
    %31 = tpu.matmul %30, %15, %cst_14 {dimension_numbers = #tpu.dot_dimension_numbers<[1], [0], [0], [1], [0, 0, 1, 1], [], []>} : vector<16x16xf32>, vector<16x8xf32>, vector<16x8xf32> -> vector<16x8xf32>
    %32 = arith.truncf %31 : vector<16x8xf32> to vector<16x8xbf16>
    %c0_15 = arith.constant 0 : index
    %c0_16 = arith.constant 0 : index
    %c0_17 = arith.constant 0 : index
    %33 = vector.load %arg5[%c0_15, %c0_16, %c0_17] : memref<4x8x32xbf16, #tpu.memory_space<vmem>>, vector<1x8x32xbf16>
    %34 = vector.shape_cast %33 : vector<1x8x32xbf16> to vector<8x32xbf16>
    %cst_18 = arith.constant dense<0.000000e+00> : vector<16x32xf32>
    %35 = tpu.matmul %32, %34, %cst_18 {dimension_numbers = #tpu.dot_dimension_numbers<[1], [0], [0], [1], [0, 0, 1, 1], [], []>} : vector<16x8xbf16>, vector<8x32xbf16>, vector<16x32xf32> -> vector<16x32xf32>
    %36 = arith.addf %12, %35 : vector<16x32xf32>
    %37 = vector.extract_strided_slice %7 {offsets = [0, 8], sizes = [16, 8], strides = [1, 1]} : vector<16x96xf32> to vector<16x8xf32>
    %38 = vector.extract_strided_slice %7 {offsets = [0, 40], sizes = [16, 8], strides = [1, 1]} : vector<16x96xf32> to vector<16x8xf32>
    %39 = vector.extract_strided_slice %7 {offsets = [0, 72], sizes = [16, 8], strides = [1, 1]} : vector<16x96xf32> to vector<16x8xf32>
    %cst_19 = arith.constant dense<0.000000e+00> : vector<16x16xf32>
    %40 = tpu.matmul %37, %38, %cst_19 {dimension_numbers = #tpu.dot_dimension_numbers<[1], [1], [0], [0], [0, 0, 1, 0], [], []>} : vector<16x8xf32>, vector<16x8xf32>, vector<16x16xf32> -> vector<16x16xf32>
    %cst_20 = arith.constant 0.353553385 : f32
    %41 = vector.broadcast %cst_20 : f32 to vector<16x16xf32>
    %42 = arith.mulf %40, %41 : vector<16x16xf32>
    %43 = arith.addf %42, %11 : vector<16x16xf32>
    %cst_21 = arith.constant dense<0xFF800000> : vector<16xf32>
    %44 = vector.multi_reduction <maximumf>, %43, %cst_21 [1] : vector<16x16xf32> to vector<16xf32>
    %45 = vector.shape_cast %44 : vector<16xf32> to vector<16x1xf32>
    %46 = vector.broadcast %45 : vector<16x1xf32> to vector<16x16xf32>
    %47 = arith.subf %43, %46 : vector<16x16xf32>
    %48 = math.exp %47 : vector<16x16xf32>
    %cst_22 = arith.constant dense<0.000000e+00> : vector<16xf32>
    %49 = vector.multi_reduction <add>, %48, %cst_22 [1] : vector<16x16xf32> to vector<16xf32>
    %50 = vector.shape_cast %49 : vector<16xf32> to vector<16x1xf32>
    %51 = tpu.reciprocal %50 {approx = true} : vector<16x1xf32> -> vector<16x1xf32>
    %52 = vector.broadcast %51 : vector<16x1xf32> to vector<16x16xf32>
    %53 = arith.mulf %48, %52 : vector<16x16xf32>
    %54 = arith.mulf %53, %1 : vector<16x16xf32>
    %cst_23 = arith.constant dense<0.000000e+00> : vector<16x8xf32>
    %55 = tpu.matmul %54, %39, %cst_23 {dimension_numbers = #tpu.dot_dimension_numbers<[1], [0], [0], [1], [0, 0, 1, 1], [], []>} : vector<16x16xf32>, vector<16x8xf32>, vector<16x8xf32> -> vector<16x8xf32>
    %56 = arith.truncf %55 : vector<16x8xf32> to vector<16x8xbf16>
    %c1 = arith.constant 1 : index
    %c0_24 = arith.constant 0 : index
    %c0_25 = arith.constant 0 : index
    %57 = vector.load %arg5[%c1, %c0_24, %c0_25] : memref<4x8x32xbf16, #tpu.memory_space<vmem>>, vector<1x8x32xbf16>
    %58 = vector.shape_cast %57 : vector<1x8x32xbf16> to vector<8x32xbf16>
    %cst_26 = arith.constant dense<0.000000e+00> : vector<16x32xf32>
    %59 = tpu.matmul %56, %58, %cst_26 {dimension_numbers = #tpu.dot_dimension_numbers<[1], [0], [0], [1], [0, 0, 1, 1], [], []>} : vector<16x8xbf16>, vector<8x32xbf16>, vector<16x32xf32> -> vector<16x32xf32>
    %60 = arith.addf %36, %59 : vector<16x32xf32>
    %61 = vector.extract_strided_slice %7 {offsets = [0, 16], sizes = [16, 8], strides = [1, 1]} : vector<16x96xf32> to vector<16x8xf32>
    %62 = vector.extract_strided_slice %7 {offsets = [0, 48], sizes = [16, 8], strides = [1, 1]} : vector<16x96xf32> to vector<16x8xf32>
    %63 = vector.extract_strided_slice %7 {offsets = [0, 80], sizes = [16, 8], strides = [1, 1]} : vector<16x96xf32> to vector<16x8xf32>
    %cst_27 = arith.constant dense<0.000000e+00> : vector<16x16xf32>
    %64 = tpu.matmul %61, %62, %cst_27 {dimension_numbers = #tpu.dot_dimension_numbers<[1], [1], [0], [0], [0, 0, 1, 0], [], []>} : vector<16x8xf32>, vector<16x8xf32>, vector<16x16xf32> -> vector<16x16xf32>
    %cst_28 = arith.constant 0.353553385 : f32
    %65 = vector.broadcast %cst_28 : f32 to vector<16x16xf32>
    %66 = arith.mulf %64, %65 : vector<16x16xf32>
    %67 = arith.addf %66, %11 : vector<16x16xf32>
    %cst_29 = arith.constant dense<0xFF800000> : vector<16xf32>
    %68 = vector.multi_reduction <maximumf>, %67, %cst_29 [1] : vector<16x16xf32> to vector<16xf32>
    %69 = vector.shape_cast %68 : vector<16xf32> to vector<16x1xf32>
    %70 = vector.broadcast %69 : vector<16x1xf32> to vector<16x16xf32>
    %71 = arith.subf %67, %70 : vector<16x16xf32>
    %72 = math.exp %71 : vector<16x16xf32>
    %cst_30 = arith.constant dense<0.000000e+00> : vector<16xf32>
    %73 = vector.multi_reduction <add>, %72, %cst_30 [1] : vector<16x16xf32> to vector<16xf32>
    %74 = vector.shape_cast %73 : vector<16xf32> to vector<16x1xf32>
    %75 = tpu.reciprocal %74 {approx = true} : vector<16x1xf32> -> vector<16x1xf32>
    %76 = vector.broadcast %75 : vector<16x1xf32> to vector<16x16xf32>
    %77 = arith.mulf %72, %76 : vector<16x16xf32>
    %78 = arith.mulf %77, %1 : vector<16x16xf32>
    %cst_31 = arith.constant dense<0.000000e+00> : vector<16x8xf32>
    %79 = tpu.matmul %78, %63, %cst_31 {dimension_numbers = #tpu.dot_dimension_numbers<[1], [0], [0], [1], [0, 0, 1, 1], [], []>} : vector<16x16xf32>, vector<16x8xf32>, vector<16x8xf32> -> vector<16x8xf32>
    %80 = arith.truncf %79 : vector<16x8xf32> to vector<16x8xbf16>
    %c2 = arith.constant 2 : index
    %c0_32 = arith.constant 0 : index
    %c0_33 = arith.constant 0 : index
    %81 = vector.load %arg5[%c2, %c0_32, %c0_33] : memref<4x8x32xbf16, #tpu.memory_space<vmem>>, vector<1x8x32xbf16>
    %82 = vector.shape_cast %81 : vector<1x8x32xbf16> to vector<8x32xbf16>
    %cst_34 = arith.constant dense<0.000000e+00> : vector<16x32xf32>
    %83 = tpu.matmul %80, %82, %cst_34 {dimension_numbers = #tpu.dot_dimension_numbers<[1], [0], [0], [1], [0, 0, 1, 1], [], []>} : vector<16x8xbf16>, vector<8x32xbf16>, vector<16x32xf32> -> vector<16x32xf32>
    %84 = arith.addf %60, %83 : vector<16x32xf32>
    %85 = vector.extract_strided_slice %7 {offsets = [0, 24], sizes = [16, 8], strides = [1, 1]} : vector<16x96xf32> to vector<16x8xf32>
    %86 = vector.extract_strided_slice %7 {offsets = [0, 56], sizes = [16, 8], strides = [1, 1]} : vector<16x96xf32> to vector<16x8xf32>
    %87 = vector.extract_strided_slice %7 {offsets = [0, 88], sizes = [16, 8], strides = [1, 1]} : vector<16x96xf32> to vector<16x8xf32>
    %cst_35 = arith.constant dense<0.000000e+00> : vector<16x16xf32>
    %88 = tpu.matmul %85, %86, %cst_35 {dimension_numbers = #tpu.dot_dimension_numbers<[1], [1], [0], [0], [0, 0, 1, 0], [], []>} : vector<16x8xf32>, vector<16x8xf32>, vector<16x16xf32> -> vector<16x16xf32>
    %cst_36 = arith.constant 0.353553385 : f32
    %89 = vector.broadcast %cst_36 : f32 to vector<16x16xf32>
    %90 = arith.mulf %88, %89 : vector<16x16xf32>
    %91 = arith.addf %90, %11 : vector<16x16xf32>
    %cst_37 = arith.constant dense<0xFF800000> : vector<16xf32>
    %92 = vector.multi_reduction <maximumf>, %91, %cst_37 [1] : vector<16x16xf32> to vector<16xf32>
    %93 = vector.shape_cast %92 : vector<16xf32> to vector<16x1xf32>
    %94 = vector.broadcast %93 : vector<16x1xf32> to vector<16x16xf32>
    %95 = arith.subf %91, %94 : vector<16x16xf32>
    %96 = math.exp %95 : vector<16x16xf32>
    %cst_38 = arith.constant dense<0.000000e+00> : vector<16xf32>
    %97 = vector.multi_reduction <add>, %96, %cst_38 [1] : vector<16x16xf32> to vector<16xf32>
    %98 = vector.shape_cast %97 : vector<16xf32> to vector<16x1xf32>
    %99 = tpu.reciprocal %98 {approx = true} : vector<16x1xf32> -> vector<16x1xf32>
    %100 = vector.broadcast %99 : vector<16x1xf32> to vector<16x16xf32>
    %101 = arith.mulf %96, %100 : vector<16x16xf32>
    %102 = arith.mulf %101, %1 : vector<16x16xf32>
    %cst_39 = arith.constant dense<0.000000e+00> : vector<16x8xf32>
    %103 = tpu.matmul %102, %87, %cst_39 {dimension_numbers = #tpu.dot_dimension_numbers<[1], [0], [0], [1], [0, 0, 1, 1], [], []>} : vector<16x16xf32>, vector<16x8xf32>, vector<16x8xf32> -> vector<16x8xf32>
    %104 = arith.truncf %103 : vector<16x8xf32> to vector<16x8xbf16>
    %c3 = arith.constant 3 : index
    %c0_40 = arith.constant 0 : index
    %c0_41 = arith.constant 0 : index
    %105 = vector.load %arg5[%c3, %c0_40, %c0_41] : memref<4x8x32xbf16, #tpu.memory_space<vmem>>, vector<1x8x32xbf16>
    %106 = vector.shape_cast %105 : vector<1x8x32xbf16> to vector<8x32xbf16>
    %cst_42 = arith.constant dense<0.000000e+00> : vector<16x32xf32>
    %107 = tpu.matmul %104, %106, %cst_42 {dimension_numbers = #tpu.dot_dimension_numbers<[1], [0], [0], [1], [0, 0, 1, 1], [], []>} : vector<16x8xbf16>, vector<8x32xbf16>, vector<16x32xf32> -> vector<16x32xf32>
    %108 = arith.addf %84, %107 : vector<16x32xf32>
    %c0_43 = arith.constant 0 : index
    %c0_44 = arith.constant 0 : index
    %109 = vector.load %arg6[%c0_43, %c0_44] : memref<1x32xf32, #tpu.memory_space<vmem>>, vector<1x32xf32>
    %110 = vector.broadcast %109 : vector<1x32xf32> to vector<16x32xf32>
    %111 = arith.addf %108, %110 : vector<16x32xf32>
    %c0_45 = arith.constant 0 : index
    %c0_46 = arith.constant 0 : index
    %112 = vector.load %arg11[%c0_45, %c0_46] : memref<1x32xf32, #tpu.memory_space<vmem>>, vector<1x32xf32>
    %113 = vector.shape_cast %112 : vector<1x32xf32> to vector<1x32xf32>
    %114 = vector.broadcast %113 : vector<1x32xf32> to vector<16x32xf32>
    %c0_47 = arith.constant 0 : index
    %c0_48 = arith.constant 0 : index
    %115 = vector.load %arg12[%c0_47, %c0_48] : memref<1x32xf32, #tpu.memory_space<vmem>>, vector<1x32xf32>
    %116 = vector.shape_cast %115 : vector<1x32xf32> to vector<1x32xf32>
    %117 = vector.broadcast %116 : vector<1x32xf32> to vector<16x32xf32>
    %cst_49 = arith.constant dense<0.000000e+00> : vector<16xf32>
    %118 = vector.multi_reduction <add>, %111, %cst_49 [1] : vector<16x32xf32> to vector<16xf32>
    %119 = vector.shape_cast %118 : vector<16xf32> to vector<16x1xf32>
    %cst_50 = arith.constant 3.200000e+01 : f32
    %120 = vector.broadcast %cst_50 : f32 to vector<16x1xf32>
    %121 = arith.divf %119, %120 : vector<16x1xf32>
    %122 = vector.broadcast %121 : vector<16x1xf32> to vector<16x32xf32>
    %123 = arith.subf %111, %122 : vector<16x32xf32>
    %124 = arith.mulf %123, %123 : vector<16x32xf32>
    %cst_51 = arith.constant dense<0.000000e+00> : vector<16xf32>
    %125 = vector.multi_reduction <add>, %124, %cst_51 [1] : vector<16x32xf32> to vector<16xf32>
    %126 = vector.shape_cast %125 : vector<16xf32> to vector<16x1xf32>
    %cst_52 = arith.constant 0.0322580636 : f32
    %127 = vector.broadcast %cst_52 : f32 to vector<16x1xf32>
    %128 = arith.mulf %126, %127 : vector<16x1xf32>
    %129 = math.sqrt %128 : vector<16x1xf32>
    %130 = arith.mulf %114, %123 : vector<16x32xf32>
    %cst_53 = arith.constant 9.99999997E-7 : f32
    %131 = vector.broadcast %cst_53 : f32 to vector<16x1xf32>
    %132 = arith.addf %129, %131 : vector<16x1xf32>
    %133 = tpu.reciprocal %132 {approx = true} : vector<16x1xf32> -> vector<16x1xf32>
    %134 = vector.broadcast %133 : vector<16x1xf32> to vector<16x32xf32>
    %135 = arith.mulf %130, %134 : vector<16x32xf32>
    %136 = arith.addf %135, %117 : vector<16x32xf32>
    %137 = arith.addf %0, %136 : vector<16x32xf32>
    %138 = arith.truncf %137 : vector<16x32xf32> to vector<16x32xbf16>
    %c0_54 = arith.constant 0 : index
    %c0_55 = arith.constant 0 : index
    %139 = vector.load %arg7[%c0_54, %c0_55] : memref<32x32xbf16, #tpu.memory_space<vmem>>, vector<32x32xbf16>
    %cst_56 = arith.constant dense<0.000000e+00> : vector<16x32xf32>
    %140 = tpu.matmul %138, %139, %cst_56 {dimension_numbers = #tpu.dot_dimension_numbers<[1], [0], [0], [1], [0, 0, 1, 1], [], []>} : vector<16x32xbf16>, vector<32x32xbf16>, vector<16x32xf32> -> vector<16x32xf32>
    %c0_57 = arith.constant 0 : index
    %c0_58 = arith.constant 0 : index
    %141 = vector.load %arg8[%c0_57, %c0_58] : memref<1x32xf32, #tpu.memory_space<vmem>>, vector<1x32xf32>
    %142 = vector.broadcast %141 : vector<1x32xf32> to vector<16x32xf32>
    %143 = arith.addf %140, %142 : vector<16x32xf32>
    %144 = arith.truncf %143 : vector<16x32xf32> to vector<16x32xbf16>
    %c0_59 = arith.constant 0 : index
    %c0_60 = arith.constant 0 : index
    %145 = vector.load %arg9[%c0_59, %c0_60] : memref<32x32xbf16, #tpu.memory_space<vmem>>, vector<32x32xbf16>
    %cst_61 = arith.constant dense<0.000000e+00> : vector<16x32xf32>
    %146 = tpu.matmul %144, %145, %cst_61 {dimension_numbers = #tpu.dot_dimension_numbers<[1], [0], [0], [1], [0, 0, 1, 1], [], []>} : vector<16x32xbf16>, vector<32x32xbf16>, vector<16x32xf32> -> vector<16x32xf32>
    %c0_62 = arith.constant 0 : index
    %c0_63 = arith.constant 0 : index
    %147 = vector.load %arg10[%c0_62, %c0_63] : memref<1x32xf32, #tpu.memory_space<vmem>>, vector<1x32xf32>
    %148 = vector.broadcast %147 : vector<1x32xf32> to vector<16x32xf32>
    %149 = arith.addf %146, %148 : vector<16x32xf32>
    %cst_64 = arith.constant dense<0.000000e+00> : vector<16xf32>
    %150 = vector.multi_reduction <add>, %149, %cst_64 [1] : vector<16x32xf32> to vector<16xf32>
    %151 = vector.shape_cast %150 : vector<16xf32> to vector<16x1xf32>
    %cst_65 = arith.constant 3.200000e+01 : f32
    %152 = vector.broadcast %cst_65 : f32 to vector<16x1xf32>
    %153 = arith.divf %151, %152 : vector<16x1xf32>
    %154 = vector.broadcast %153 : vector<16x1xf32> to vector<16x32xf32>
    %155 = arith.subf %149, %154 : vector<16x32xf32>
    %156 = arith.mulf %155, %155 : vector<16x32xf32>
    %cst_66 = arith.constant dense<0.000000e+00> : vector<16xf32>
    %157 = vector.multi_reduction <add>, %156, %cst_66 [1] : vector<16x32xf32> to vector<16xf32>
    %158 = vector.shape_cast %157 : vector<16xf32> to vector<16x1xf32>
    %cst_67 = arith.constant 0.0322580636 : f32
    %159 = vector.broadcast %cst_67 : f32 to vector<16x1xf32>
    %160 = arith.mulf %158, %159 : vector<16x1xf32>
    %161 = math.sqrt %160 : vector<16x1xf32>
    %162 = arith.mulf %114, %155 : vector<16x32xf32>
    %cst_68 = arith.constant 9.99999997E-7 : f32
    %163 = vector.broadcast %cst_68 : f32 to vector<16x1xf32>
    %164 = arith.addf %161, %163 : vector<16x1xf32>
    %165 = tpu.reciprocal %164 {approx = true} : vector<16x1xf32> -> vector<16x1xf32>
    %166 = vector.broadcast %165 : vector<16x1xf32> to vector<16x32xf32>
    %167 = arith.mulf %162, %166 : vector<16x32xf32>
    %168 = arith.addf %167, %117 : vector<16x32xf32>
    %169 = arith.addf %137, %168 : vector<16x32xf32>
    %cst_69 = arith.constant dense<0.000000e+00> : vector<16xf32>
    %170 = vector.multi_reduction <add>, %169, %cst_69 [1] : vector<16x32xf32> to vector<16xf32>
    %171 = vector.shape_cast %170 : vector<16xf32> to vector<16x1xf32>
    %cst_70 = arith.constant 3.200000e+01 : f32
    %172 = vector.broadcast %cst_70 : f32 to vector<16x1xf32>
    %173 = arith.divf %171, %172 : vector<16x1xf32>
    %174 = vector.broadcast %173 : vector<16x1xf32> to vector<16x32xf32>
    %175 = arith.subf %169, %174 : vector<16x32xf32>
    %176 = arith.mulf %175, %175 : vector<16x32xf32>
    %cst_71 = arith.constant dense<0.000000e+00> : vector<16xf32>
    %177 = vector.multi_reduction <add>, %176, %cst_71 [1] : vector<16x32xf32> to vector<16xf32>
    %178 = vector.shape_cast %177 : vector<16xf32> to vector<16x1xf32>
    %cst_72 = arith.constant 0.0322580636 : f32
    %179 = vector.broadcast %cst_72 : f32 to vector<16x1xf32>
    %180 = arith.mulf %178, %179 : vector<16x1xf32>
    %181 = math.sqrt %180 : vector<16x1xf32>
    %182 = arith.mulf %114, %175 : vector<16x32xf32>
    %cst_73 = arith.constant 9.99999997E-7 : f32
    %183 = vector.broadcast %cst_73 : f32 to vector<16x1xf32>
    %184 = arith.addf %181, %183 : vector<16x1xf32>
    %185 = tpu.reciprocal %184 {approx = true} : vector<16x1xf32> -> vector<16x1xf32>
    %186 = vector.broadcast %185 : vector<16x1xf32> to vector<16x32xf32>
    %187 = arith.mulf %182, %186 : vector<16x32xf32>
    %188 = arith.addf %187, %117 : vector<16x32xf32>
    %c0_74 = arith.constant 0 : index
    %c0_75 = arith.constant 0 : index
    %189 = vector.load %arg13[%c0_74, %c0_75] : memref<16x32xf32, #tpu.memory_space<vmem>>, vector<16x32xf32>
    tpu.vector_store %arg13[%c0_74, %c0_75], %188 {strides = array<i32>} : memref<16x32xf32, #tpu.memory_space<vmem>>, vector<16x32xf32>,
    return
  }
  func.func @transform_0(%arg0: i32) -> (i32, i32) {
    %c0_i32 = arith.constant 0 : i32
    %c0_i32_0 = arith.constant 0 : i32
    %c0_i32_1 = arith.constant 0 : i32
    return %c0_i32, %c0_i32_0 : i32, i32
  }
  func.func @transform_1(%arg0: i32) -> (i32, i32) {
    %c0_i32 = arith.constant 0 : i32
    %c0_i32_0 = arith.constant 0 : i32
    %c0_i32_1 = arith.constant 0 : i32
    return %c0_i32, %c0_i32_0 : i32, i32
  }
  func.func @transform_2(%arg0: i32) -> (i32, i32) {
    %c0_i32 = arith.constant 0 : i32
    %c0_i32_0 = arith.constant 0 : i32
    %c0_i32_1 = arith.constant 0 : i32
    return %c0_i32, %c0_i32_0 : i32, i32
  }
  func.func @transform_3(%arg0: i32) -> (i32, i32) {
    %c0_i32 = arith.constant 0 : i32
    %c0_i32_0 = arith.constant 0 : i32
    %c0_i32_1 = arith.constant 0 : i32
    return %c0_i32, %c0_i32_0 : i32, i32
  }
  func.func @transform_4(%arg0: i32) -> (i32, i32, i32) {
    %c0_i32 = arith.constant 0 : i32
    %c0_i32_0 = arith.constant 0 : i32
    %c0_i32_1 = arith.constant 0 : i32
    %c0_i32_2 = arith.constant 0 : i32
    return %c0_i32, %c0_i32_0, %c0_i32_1 : i32, i32, i32
  }
  func.func @transform_5(%arg0: i32) -> (i32, i32) {
    %c0_i32 = arith.constant 0 : i32
    %c0_i32_0 = arith.constant 0 : i32
    %c0_i32_1 = arith.constant 0 : i32
    return %c0_i32, %c0_i32_0 : i32, i32
  }
  func.func @transform_6(%arg0: i32) -> (i32, i32) {
    %c0_i32 = arith.constant 0 : i32
    %c0_i32_0 = arith.constant 0 : i32
    %c0_i32_1 = arith.constant 0 : i32
    return %c0_i32, %c0_i32_0 : i32, i32
  }
  func.func @transform_7(%arg0: i32) -> (i32, i32) {
    %c0_i32 = arith.constant 0 : i32
    %c0_i32_0 = arith.constant 0 : i32
    %c0_i32_1 = arith.constant 0 : i32
    return %c0_i32, %c0_i32_0 : i32, i32
  }
  func.func @transform_8(%arg0: i32) -> (i32, i32) {
    %c0_i32 = arith.constant 0 : i32
    %c0_i32_0 = arith.constant 0 : i32
    %c0_i32_1 = arith.constant 0 : i32
    return %c0_i32, %c0_i32_0 : i32, i32
  }
  func.func @transform_9(%arg0: i32) -> (i32, i32) {
    %c0_i32 = arith.constant 0 : i32
    %c0_i32_0 = arith.constant 0 : i32
    %c0_i32_1 = arith.constant 0 : i32
    return %c0_i32, %c0_i32_0 : i32, i32
  }
  func.func @transform_10(%arg0: i32) -> (i32, i32) {
    %c0_i32 = arith.constant 0 : i32
    %c0_i32_0 = arith.constant 0 : i32
    %c0_i32_1 = arith.constant 0 : i32
    return %c0_i32, %c0_i32_0 : i32, i32
  }
  func.func @transform_11(%arg0: i32) -> (i32, i32) {
    %c0_i32 = arith.constant 0 : i32
    %c0_i32_0 = arith.constant 0 : i32
    %c0_i32_1 = arith.constant 0 : i32
    return %c0_i32, %c0_i32_0 : i32, i32
  }
  func.func @transform_12(%arg0: i32) -> (i32, i32) {
    %c0_i32 = arith.constant 0 : i32
    %c0_i32_0 = arith.constant 0 : i32
    %c0_i32_1 = arith.constant 0 : i32
    return %c0_i32, %c0_i32_0 : i32, i32
  }
}

</mosaic_0001>

<llo_original>
// kernel: multi_self_att.1
$region0: #{multi_self_att.1}
  #allocation0 [shape = 'u32[]', space=smem, size = 0x4, offset = 0x4, fixed_abs, tag = 'smem constant byte address 0x4 - core index']
  #allocation1 [shape = 'u32[144,128]{1,0:T(1,128)}', space=vmem, size = 0x12000, scoped, tag = 'internal scratch']
  %s0 = inlined_call_operand.vmem [shape: f32[16,32], index: 0, kind: input, shape index: {}]
  %s1 = inlined_call_operand.vmem [shape: f32[16,16], index: 1, kind: input, shape index: {}]
  %s2 = inlined_call_operand.vmem [shape: bf16[32,96], index: 2, kind: input, shape index: {}]
  %s3 = inlined_call_operand.vmem [shape: f32[1,96], index: 3, kind: input, shape index: {}]
  %s4 = inlined_call_operand.vmem [shape: bf16[4,8,32], index: 4, kind: input, shape index: {}]
  %s5 = inlined_call_operand.vmem [shape: f32[1,32], index: 5, kind: input, shape index: {}]
  %s6 = inlined_call_operand.vmem [shape: bf16[32,32], index: 6, kind: input, shape index: {}]
  %s7 = inlined_call_operand.vmem [shape: f32[1,32], index: 7, kind: input, shape index: {}]
  %s8 = inlined_call_operand.vmem [shape: bf16[32,32], index: 8, kind: input, shape index: {}]
  %s9 = inlined_call_operand.vmem [shape: f32[1,32], index: 9, kind: input, shape index: {}]
  %s10 = inlined_call_operand.vmem [shape: f32[1,32], index: 10, kind: input, shape index: {}]
  %s11 = inlined_call_operand.vmem [shape: f32[1,32], index: 11, kind: input, shape index: {}]
  %s12 = inlined_call_operand.hbm [shape: f32[16,32], index: 12, kind: output, shape index: {}]
  %s13 = sld [smem:[#allocation0]]
  $region58: #{multi_self_att.1} parent=0
    _
  %s15 = ssub.s32 1, %s13
  %s16 = scalar_select 0, %s15, %s13
  $region1: #{multi_self_att.1} parent=0
    #allocation2 [shape = 'u8[8192]{0}', space=vmem, size = 0x2000, scoped, tag = 'output window, operand 0, single buffered']
    #allocation3 [shape = 's32[1]{0}', space=sflag, size = 0x4, scoped, tag = 'scoped memory for multi_self_att.1']
    %17 = vsyncpa [#allocation3], 0
    // Predicated region
    $region2: #{multi_self_att.1} parent=1 // pred_check
      _
    $region3: #{multi_self_att.1} parent=1 // pred_check_branch
      %19 = sbr.rel (0) target = $region5
    $region4: #{multi_self_att.1} parent=1 // pred_region
      _
    $region5: #{multi_self_att.1} parent=1 // pred_fallthru
      _
    // Predicated region
    $region6: #{multi_self_att.1} parent=1 // pred_check
      _
    $region7: #{multi_self_att.1} parent=1 // pred_check_branch
      %21 = sbr.rel (0) target = $region9
    $region8: #{multi_self_att.1} parent=1 // pred_region
      _
    $region9: #{multi_self_att.1} parent=1 // pred_fallthru
      _
    // Predicated region
    $region10: #{multi_self_att.1} parent=1 // pred_check
      _
    $region11: #{multi_self_att.1} parent=1 // pred_check_branch
      %23 = sbr.rel (0) target = $region13
    $region12: #{multi_self_att.1} parent=1 // pred_region
      _
    $region13: #{multi_self_att.1} parent=1 // pred_fallthru
      _
    // Predicated region
    $region14: #{multi_self_att.1} parent=1 // pred_check
      _
    $region15: #{multi_self_att.1} parent=1 // pred_check_branch
      %25 = sbr.rel (0) target = $region17
    $region16: #{multi_self_att.1} parent=1 // pred_region
      _
    $region17: #{multi_self_att.1} parent=1 // pred_fallthru
      _
    // Predicated region
    $region18: #{multi_self_att.1} parent=1 // pred_check
      _
    $region19: #{multi_self_att.1} parent=1 // pred_check_branch
      %27 = sbr.rel (0) target = $region21
    $region20: #{multi_self_att.1} parent=1 // pred_region
      _
    $region21: #{multi_self_att.1} parent=1 // pred_fallthru
      _
    // Predicated region
    $region22: #{multi_self_att.1} parent=1 // pred_check
      _
    $region23: #{multi_self_att.1} parent=1 // pred_check_branch
      %29 = sbr.rel (0) target = $region25
    $region24: #{multi_self_att.1} parent=1 // pred_region
      _
    $region25: #{multi_self_att.1} parent=1 // pred_fallthru
      _
    // Predicated region
    $region26: #{multi_self_att.1} parent=1 // pred_check
      _
    $region27: #{multi_self_att.1} parent=1 // pred_check_branch
      %31 = sbr.rel (0) target = $region29
    $region28: #{multi_self_att.1} parent=1 // pred_region
      _
    $region29: #{multi_self_att.1} parent=1 // pred_fallthru
      _
    // Predicated region
    $region30: #{multi_self_att.1} parent=1 // pred_check
      _
    $region31: #{multi_self_att.1} parent=1 // pred_check_branch
      %33 = sbr.rel (0) target = $region33
    $region32: #{multi_self_att.1} parent=1 // pred_region
      _
    $region33: #{multi_self_att.1} parent=1 // pred_fallthru
      _
    // Predicated region
    $region34: #{multi_self_att.1} parent=1 // pred_check
      _
    $region35: #{multi_self_att.1} parent=1 // pred_check_branch
      %35 = sbr.rel (0) target = $region37
    $region36: #{multi_self_att.1} parent=1 // pred_region
      _
    $region37: #{multi_self_att.1} parent=1 // pred_fallthru
      _
    // Predicated region
    $region38: #{multi_self_att.1} parent=1 // pred_check
      _
    $region39: #{multi_self_att.1} parent=1 // pred_check_branch
      %37 = sbr.rel (0) target = $region41
    $region40: #{multi_self_att.1} parent=1 // pred_region
      _
    $region41: #{multi_self_att.1} parent=1 // pred_fallthru
      _
    // Predicated region
    $region42: #{multi_self_att.1} parent=1 // pred_check
      _
    $region43: #{multi_self_att.1} parent=1 // pred_check_branch
      %39 = sbr.rel (0) target = $region45
    $region44: #{multi_self_att.1} parent=1 // pred_region
      _
    $region45: #{multi_self_att.1} parent=1 // pred_fallthru
      _
    // Predicated region
    $region46: #{multi_self_att.1} parent=1 // pred_check
      _
    $region47: #{multi_self_att.1} parent=1 // pred_check_branch
      %41 = sbr.rel (0) target = $region49
    $region48: #{multi_self_att.1} parent=1 // pred_region
      _
    $region49: #{multi_self_att.1} parent=1 // pred_fallthru
      _
    %v43 = vld [vmem:[%s0] sm:$0xff]
    %v44 = vld [vmem:[%s0 + $0x8] sm:$0xff]
    %v45 = vld [vmem:[%s1] sm:$0xff]
    %v46 = vld [vmem:[%s1 + $0x8] sm:$0xff]
    %v47 = vpack.c.bf16 %v44, %v43
    %v48 = vld [vmem:[%s2] sm:$0xf]
    %v49 = vld [vmem:[%s2 + $0x4] sm:$0xf]
    %v50 = vld [vmem:[%s2 + $0x8] sm:$0xf]
    %v51 = vld [vmem:[%s2 + $0xc] sm:$0xf]
    %v52 = vld [vmem:[%s3] sm:$0x1]
    %v54 = vlaneseq
    %v55 = vshrl.u32 %v54, 7
    %v56 = vsub.s32 0, %v55
    %v57 = vrot.slane %v52, %v56
    %v63 = vunpack.c.l.b16 %v48
    %v64 = vunpack.c.l.b16 %v49
    %v65 = vunpack.c.l.b16 %v50
    %v66 = vunpack.c.l.b16 %v51
    %v67 = vpack.c.b16 %v64, %v63
    %v68 = vpack.c.b16 %v66, %v65
    %vm71 = vcmask 261120
    %v73 = vsel %vm71, %v47, 0
    %75 = vmatprep.subr.bf16.mxu0 0
    %76 = vmatpush1.bf16.msra.mxu0 %v67
    %77 = vmatprep.subr.bf16.mxu0 0
    %78 = vmatpush1.bf16.msra.mxu0 %v68
    %79 = vmatprep.subr.bf16.mxu0 0
    %80 = vmatpush1.bf16.msra.mxu0 0
    %81 = vmatprep.subr.bf16.mxu0 0
    %82 = vmatpush1.bf16.msra.mxu0 0
    %83 = vmatprep.subr.bf16.mxu0 0
    %84 = vmatpush1.bf16.msra.mxu0 0
    %85 = vmatprep.subr.bf16.mxu0 0
    %86 = vmatpush1.bf16.msra.mxu0 0
    %87 = vmatprep.subr.bf16.mxu0 0
    %88 = vmatpush1.bf16.msra.mxu0 0
    %89 = vmatprep.subr.bf16.mxu0 0
    %90 = vmatpush1.bf16.msra.mxu0 0
    %91 = vmatprep.subr.bf16.mxu0 0
    %92 = vmatpush1.bf16.msra.mxu0 0
    %93 = vmatprep.subr.bf16.mxu0 0
    %94 = vmatpush1.bf16.msra.mxu0 0
    %95 = vmatprep.subr.bf16.mxu0 0
    %96 = vmatpush1.bf16.msra.mxu0 0
    %97 = vmatprep.subr.bf16.mxu0 0
    %98 = vmatpush1.bf16.msra.mxu0 0
    %99 = vmatprep.subr.bf16.mxu0 0
    %100 = vmatpush1.bf16.msra.mxu0 0
    %101 = vmatprep.subr.bf16.mxu0 0
    %102 = vmatpush1.bf16.msra.mxu0 0
    %103 = vmatprep.subr.bf16.mxu0 0
    %104 = vmatpush1.bf16.msra.mxu0 0
    %105 = vmatprep.subr.bf16.mxu0 0
    %106 = vmatpush1.bf16.msra.mxu0 0
    %107 = vmatprep.mubr.bf16.mxu0 0
    %108 = vmatmul.mubr.bf16.gmra.mrb[0].mxu0 %v73
    %v109 = vpop.f32.mrb[0].mxu0
    %v110 = vadd.f32 %v57, %v109
    %v111 = vpop.f32.mrb[0].mxu0
    %v112 = vpop.f32.mrb[0].mxu0
    %v113 = vadd.f32 %v57, %v112
    %v114 = vpop.f32.mrb[0].mxu0
    %115 = vdwg.mxu0
    %v116 = vsub.f32 1.0, %v45
    %v117 = vsub.f32 1.0, %v46
    %v118 = vmul.f32 %v116, -1e+09
    %v119 = vmul.f32 %v117, -1e+09
    %122 = vrot.lane.b32.xlu0 %v110, 96
    %v123 = vpop.permute.xlu0 %122
    %124 = vrot.lane.b32.xlu0 %v113, 96
    %v125 = vpop.permute.xlu0 %124
    %vm126 = vcmask 64512
    %v127 = vsel %vm126, %v110, 0
    %v129 = vsel %vm126, %v113, 0
    %v131 = vsel %vm126, %v123, 0
    %v133 = vsel %vm126, %v125, 0
    %135 = vmatprep.subr.mxu0 0.0
    %136 = vmatpush1.xpose.msra.mxu0 %v131
    %137 = vmatprep.subr.mxu0 0.0
    %138 = vmatpush1.xpose.msra.mxu0 %v133
    %139 = vmatprep.subr.mxu0 0.0
    %140 = vmatpush1.xpose.msra.mxu0 0.0
    %141 = vmatprep.subr.mxu0 0.0
    %142 = vmatpush1.xpose.msra.mxu0 0.0
    %143 = vmatprep.subr.mxu0 0.0
    %144 = vmatpush1.xpose.msra.mxu0 0.0
    %145 = vmatprep.subr.mxu0 0.0
    %146 = vmatpush1.xpose.msra.mxu0 0.0
    %147 = vmatprep.subr.mxu0 0.0
    %148 = vmatpush1.xpose.msra.mxu0 0.0
    %149 = vmatprep.subr.mxu0 0.0
    %150 = vmatpush1.xpose.msra.mxu0 0.0
    %151 = vmatprep.subr.mxu0 0.0
    %152 = vmatpush1.xpose.msra.mxu0 0.0
    %153 = vmatprep.subr.mxu0 0.0
    %154 = vmatpush1.xpose.msra.mxu0 0.0
    %155 = vmatprep.subr.mxu0 0.0
    %156 = vmatpush1.xpose.msra.mxu0 0.0
    %157 = vmatprep.subr.mxu0 0.0
    %158 = vmatpush1.xpose.msra.mxu0 0.0
    %159 = vmatprep.subr.mxu0 0.0
    %160 = vmatpush1.xpose.msra.mxu0 0.0
    %161 = vmatprep.subr.mxu0 0.0
    %162 = vmatpush1.xpose.msra.mxu0 0.0
    %163 = vmatprep.subr.mxu0 0.0
    %164 = vmatpush1.xpose.msra.mxu0 0.0
    %165 = vmatprep.subr.mxu0 0.0
    %166 = vmatpush1.xpose.msra.mxu0 0.0
    %167 = vmatprep.subr.mxu0 0.0
    %168 = vmatpush1.xpose.msra.mxu0 0.0
    %169 = vmatprep.subr.mxu0 0.0
    %170 = vmatpush1.xpose.msra.mxu0 0.0
    %171 = vmatprep.subr.mxu0 0.0
    %172 = vmatpush1.xpose.msra.mxu0 0.0
    %173 = vmatprep.subr.mxu0 0.0
    %174 = vmatpush1.xpose.msra.mxu0 0.0
    %175 = vmatprep.subr.mxu0 0.0
    %176 = vmatpush1.xpose.msra.mxu0 0.0
    %177 = vmatprep.subr.mxu0 0.0
    %178 = vmatpush1.xpose.msra.mxu0 0.0
    %179 = vmatprep.subr.mxu0 0.0
    %180 = vmatpush1.xpose.msra.mxu0 0.0
    %181 = vmatprep.subr.mxu0 0.0
    %182 = vmatpush1.xpose.msra.mxu0 0.0
    %183 = vmatprep.subr.mxu0 0.0
    %184 = vmatpush1.xpose.msra.mxu0 0.0
    %185 = vmatprep.subr.mxu0 0.0
    %186 = vmatpush1.xpose.msra.mxu0 0.0
    %187 = vmatprep.subr.mxu0 0.0
    %188 = vmatpush1.xpose.msra.mxu0 0.0
    %189 = vmatprep.subr.mxu0 0.0
    %190 = vmatpush1.xpose.msra.mxu0 0.0
    %191 = vmatprep.subr.mxu0 0.0
    %192 = vmatpush1.xpose.msra.mxu0 0.0
    %193 = vmatprep.subr.mxu0 0.0
    %194 = vmatpush1.xpose.msra.mxu0 0.0
    %195 = vmatprep.subr.mxu0 0.0
    %196 = vmatpush1.xpose.msra.mxu0 0.0
    %197 = vmatprep.subr.mxu0 0.0
    %198 = vmatpush1.xpose.msra.mxu0 0.0
    %199 = vmatprep.mubr.f32.mxu0 0.0
    %200 = vmatmul.mubr.f32.gmra.mrb[0].mxu0 %v127
    %v201 = vpop.f32.mrb[0].mxu0
    %v202 = vadd.f32 0.0, %v201
    %v203 = vpop.f32.mrb[0].mxu0
    %204 = vmatprep.mubr.f32.mxu0 0.0
    %205 = vmatmul.mubr.f32.gmra.mrb[0].mxu0 %v129
    %v206 = vpop.f32.mrb[0].mxu0
    %v207 = vadd.f32 0.0, %v206
    %v208 = vpop.f32.mrb[0].mxu0
    %209 = vdwg.mxu0
    %v210 = vmul.f32 %v202, 0.35355338
    %v211 = vmul.f32 %v207, 0.35355338
    %v212 = vadd.f32 %v210, %v118
    %v213 = vadd.f32 %v211, %v119
    %vm214 = vcmask 130048
    %v215 = vsel %vm214, %v212, -inf
    %216 = vmax.xlane.f32.xlu0 %v215
    %v217 = vpop.xlane.xlu0 %216
    %v218 = vsel %vm214, %v213, -inf
    %219 = vmax.xlane.f32.xlu0 %v218
    %v220 = vpop.xlane.xlu0 %219
    %v221 = vsub.f32 %v212, %v217
    %v222 = vsub.f32 %v213, %v220
    %v223 = vmul.f32 %v221, 1.442695
    %v224 = vpow.pop %v223
    %v225 = vmul.f32 %v222, 1.442695
    %v226 = vpow.pop %v225
    %v227 = vsel %vm214, %v224, 0.0
    %228 = vadd.xlane.f32.xlu0 %v227
    %v229 = vpop.xlane.xlu0 %228
    %v230 = vsel %vm214, %v226, 0.0
    %231 = vadd.xlane.f32.xlu0 %v230
    %v232 = vpop.xlane.xlu0 %231
    %v233 = vrcp.pop %v229
    %v234 = vrcp.pop %v232
    %v235 = vmul.f32 %v224, %v233
    %v236 = vmul.f32 %v226, %v234
    %v237 = vmul.f32 %v235, %v45
    %v238 = vmul.f32 %v236, %v46
    %239 = vrot.lane.b32.xlu0 %v110, 64
    %v240 = vpop.permute.xlu0 %239
    %241 = vrot.lane.b32.xlu0 %v113, 64
    %v242 = vpop.permute.xlu0 %241
    %v246 = vsel %vm214, %v237, 0
    %v249 = vsel %vm214, %v238, 0
    %251 = vmatprep.subr.mxu0 0.0
    %252 = vmatpush1.msra.mxu0 %v240
    %253 = vmatprep.subr.mxu0 0.0
    %254 = vmatpush1.msra.mxu0 %v242
    %255 = vmatprep.subr.mxu0 0.0
    %256 = vmatpush1.msra.mxu0 0.0
    %257 = vmatprep.subr.mxu0 0.0
    %258 = vmatpush1.msra.mxu0 0.0
    %259 = vmatprep.subr.mxu0 0.0
    %260 = vmatpush1.msra.mxu0 0.0
    %261 = vmatprep.subr.mxu0 0.0
    %262 = vmatpush1.msra.mxu0 0.0
    %263 = vmatprep.subr.mxu0 0.0
    %264 = vmatpush1.msra.mxu0 0.0
    %265 = vmatprep.subr.mxu0 0.0
    %266 = vmatpush1.msra.mxu0 0.0
    %267 = vmatprep.subr.mxu0 0.0
    %268 = vmatpush1.msra.mxu0 0.0
    %269 = vmatprep.subr.mxu0 0.0
    %270 = vmatpush1.msra.mxu0 0.0
    %271 = vmatprep.subr.mxu0 0.0
    %272 = vmatpush1.msra.mxu0 0.0
    %273 = vmatprep.subr.mxu0 0.0
    %274 = vmatpush1.msra.mxu0 0.0
    %275 = vmatprep.subr.mxu0 0.0
    %276 = vmatpush1.msra.mxu0 0.0
    %277 = vmatprep.subr.mxu0 0.0
    %278 = vmatpush1.msra.mxu0 0.0
    %279 = vmatprep.subr.mxu0 0.0
    %280 = vmatpush1.msra.mxu0 0.0
    %281 = vmatprep.subr.mxu0 0.0
    %282 = vmatpush1.msra.mxu0 0.0
    %283 = vmatprep.subr.mxu0 0.0
    %284 = vmatpush1.msra.mxu0 0.0
    %285 = vmatprep.subr.mxu0 0.0
    %286 = vmatpush1.msra.mxu0 0.0
    %287 = vmatprep.subr.mxu0 0.0
    %288 = vmatpush1.msra.mxu0 0.0
    %289 = vmatprep.subr.mxu0 0.0
    %290 = vmatpush1.msra.mxu0 0.0
    %291 = vmatprep.subr.mxu0 0.0
    %292 = vmatpush1.msra.mxu0 0.0
    %293 = vmatprep.subr.mxu0 0.0
    %294 = vmatpush1.msra.mxu0 0.0
    %295 = vmatprep.subr.mxu0 0.0
    %296 = vmatpush1.msra.mxu0 0.0
    %297 = vmatprep.subr.mxu0 0.0
    %298 = vmatpush1.msra.mxu0 0.0
    %299 = vmatprep.subr.mxu0 0.0
    %300 = vmatpush1.msra.mxu0 0.0
    %301 = vmatprep.subr.mxu0 0.0
    %302 = vmatpush1.msra.mxu0 0.0
    %303 = vmatprep.subr.mxu0 0.0
    %304 = vmatpush1.msra.mxu0 0.0
    %305 = vmatprep.subr.mxu0 0.0
    %306 = vmatpush1.msra.mxu0 0.0
    %307 = vmatprep.subr.mxu0 0.0
    %308 = vmatpush1.msra.mxu0 0.0
    %309 = vmatprep.subr.mxu0 0.0
    %310 = vmatpush1.msra.mxu0 0.0
    %311 = vmatprep.subr.mxu0 0.0
    %312 = vmatpush1.msra.mxu0 0.0
    %313 = vmatprep.subr.mxu0 0.0
    %314 = vmatpush1.msra.mxu0 0.0
    %315 = vmatprep.mubr.f32.mxu0 0.0
    %316 = vmatmul.mubr.f32.gmra.mrb[0].mxu0 %v246
    %v317 = vpop.f32.mrb[0].mxu0
    %v318 = vadd.f32 0.0, %v317
    %v319 = vpop.f32.mrb[0].mxu0
    %320 = vmatprep.mubr.f32.mxu0 0.0
    %321 = vmatmul.mubr.f32.gmra.mrb[0].mxu0 %v249
    %v322 = vpop.f32.mrb[0].mxu0
    %v323 = vadd.f32 0.0, %v322
    %v324 = vpop.f32.mrb[0].mxu0
    %325 = vdwg.mxu0
    %v326 = vpack.c.bf16 %v323, %v318
    %v327 = vld [vmem:[%s4] sm:$0xf]
    %328 = vrot.lane.b32.xlu0 %v110, 120
    %v329 = vpop.permute.xlu0 %328
    %330 = vrot.lane.b32.xlu0 %v113, 120
    %v331 = vpop.permute.xlu0 %330
    %332 = vrot.lane.b32.xlu0 %v110, 88
    %v333 = vpop.permute.xlu0 %332
    %334 = vrot.lane.b32.xlu0 %v113, 88
    %v335 = vpop.permute.xlu0 %334
    %v336 = vsel %vm126, %v329, 0
    %v338 = vsel %vm126, %v331, 0
    %v340 = vsel %vm126, %v333, 0
    %v342 = vsel %vm126, %v335, 0
    %344 = vmatprep.subr.mxu0 0.0
    %345 = vmatpush1.xpose.msra.mxu0 %v340
    %346 = vmatprep.subr.mxu0 0.0
    %347 = vmatpush1.xpose.msra.mxu0 %v342
    %348 = vmatprep.subr.mxu0 0.0
    %349 = vmatpush1.xpose.msra.mxu0 0.0
    %350 = vmatprep.subr.mxu0 0.0
    %351 = vmatpush1.xpose.msra.mxu0 0.0
    %352 = vmatprep.subr.mxu0 0.0
    %353 = vmatpush1.xpose.msra.mxu0 0.0
    %354 = vmatprep.subr.mxu0 0.0
    %355 = vmatpush1.xpose.msra.mxu0 0.0
    %356 = vmatprep.subr.mxu0 0.0
    %357 = vmatpush1.xpose.msra.mxu0 0.0
    %358 = vmatprep.subr.mxu0 0.0
    %359 = vmatpush1.xpose.msra.mxu0 0.0
    %360 = vmatprep.subr.mxu0 0.0
    %361 = vmatpush1.xpose.msra.mxu0 0.0
    %362 = vmatprep.subr.mxu0 0.0
    %363 = vmatpush1.xpose.msra.mxu0 0.0
    %364 = vmatprep.subr.mxu0 0.0
    %365 = vmatpush1.xpose.msra.mxu0 0.0
    %366 = vmatprep.subr.mxu0 0.0
    %367 = vmatpush1.xpose.msra.mxu0 0.0
    %368 = vmatprep.subr.mxu0 0.0
    %369 = vmatpush1.xpose.msra.mxu0 0.0
    %370 = vmatprep.subr.mxu0 0.0
    %371 = vmatpush1.xpose.msra.mxu0 0.0
    %372 = vmatprep.subr.mxu0 0.0
    %373 = vmatpush1.xpose.msra.mxu0 0.0
    %374 = vmatprep.subr.mxu0 0.0
    %375 = vmatpush1.xpose.msra.mxu0 0.0
    %376 = vmatprep.subr.mxu0 0.0
    %377 = vmatpush1.xpose.msra.mxu0 0.0
    %378 = vmatprep.subr.mxu0 0.0
    %379 = vmatpush1.xpose.msra.mxu0 0.0
    %380 = vmatprep.subr.mxu0 0.0
    %381 = vmatpush1.xpose.msra.mxu0 0.0
    %382 = vmatprep.subr.mxu0 0.0
    %383 = vmatpush1.xpose.msra.mxu0 0.0
    %384 = vmatprep.subr.mxu0 0.0
    %385 = vmatpush1.xpose.msra.mxu0 0.0
    %386 = vmatprep.subr.mxu0 0.0
    %387 = vmatpush1.xpose.msra.mxu0 0.0
    %388 = vmatprep.subr.mxu0 0.0
    %389 = vmatpush1.xpose.msra.mxu0 0.0
    %390 = vmatprep.subr.mxu0 0.0
    %391 = vmatpush1.xpose.msra.mxu0 0.0
    %392 = vmatprep.subr.mxu0 0.0
    %393 = vmatpush1.xpose.msra.mxu0 0.0
    %394 = vmatprep.subr.mxu0 0.0
    %395 = vmatpush1.xpose.msra.mxu0 0.0
    %396 = vmatprep.subr.mxu0 0.0
    %397 = vmatpush1.xpose.msra.mxu0 0.0
    %398 = vmatprep.subr.mxu0 0.0
    %399 = vmatpush1.xpose.msra.mxu0 0.0
    %400 = vmatprep.subr.mxu0 0.0
    %401 = vmatpush1.xpose.msra.mxu0 0.0
    %402 = vmatprep.subr.mxu0 0.0
    %403 = vmatpush1.xpose.msra.mxu0 0.0
    %404 = vmatprep.subr.mxu0 0.0
    %405 = vmatpush1.xpose.msra.mxu0 0.0
    %406 = vmatprep.subr.mxu0 0.0
    %407 = vmatpush1.xpose.msra.mxu0 0.0
    %408 = vmatprep.mubr.f32.mxu0 0.0
    %409 = vmatmul.mubr.f32.gmra.mrb[0].mxu0 %v336
    %v410 = vpop.f32.mrb[0].mxu0
    %v411 = vadd.f32 0.0, %v410
    %v412 = vpop.f32.mrb[0].mxu0
    %413 = vmatprep.mubr.f32.mxu0 0.0
    %414 = vmatmul.mubr.f32.gmra.mrb[0].mxu0 %v338
    %v415 = vpop.f32.mrb[0].mxu0
    %v416 = vadd.f32 0.0, %v415
    %v417 = vpop.f32.mrb[0].mxu0
    %418 = vdwg.mxu0
    %v419 = vmul.f32 %v411, 0.35355338
    %v420 = vmul.f32 %v416, 0.35355338
    %v421 = vadd.f32 %v419, %v118
    %v422 = vadd.f32 %v420, %v119
    %v423 = vsel %vm214, %v421, -inf
    %424 = vmax.xlane.f32.xlu0 %v423
    %v425 = vpop.xlane.xlu0 %424
    %v426 = vsel %vm214, %v422, -inf
    %427 = vmax.xlane.f32.xlu0 %v426
    %v428 = vpop.xlane.xlu0 %427
    %v429 = vsub.f32 %v421, %v425
    %v430 = vsub.f32 %v422, %v428
    %v431 = vmul.f32 %v429, 1.442695
    %v432 = vpow.pop %v431
    %v433 = vmul.f32 %v430, 1.442695
    %v434 = vpow.pop %v433
    %v435 = vsel %vm214, %v432, 0.0
    %436 = vadd.xlane.f32.xlu0 %v435
    %v437 = vpop.xlane.xlu0 %436
    %v438 = vsel %vm214, %v434, 0.0
    %439 = vadd.xlane.f32.xlu0 %v438
    %v440 = vpop.xlane.xlu0 %439
    %v441 = vrcp.pop %v437
    %v442 = vrcp.pop %v440
    %v443 = vmul.f32 %v432, %v441
    %v444 = vmul.f32 %v434, %v442
    %v445 = vmul.f32 %v443, %v45
    %v446 = vmul.f32 %v444, %v46
    %447 = vrot.lane.b32.xlu0 %v110, 56
    %v448 = vpop.permute.xlu0 %447
    %449 = vrot.lane.b32.xlu0 %v113, 56
    %v450 = vpop.permute.xlu0 %449
    %v454 = vsel %vm214, %v445, 0
    %v457 = vsel %vm214, %v446, 0
    %459 = vmatprep.subr.mxu0 0.0
    %460 = vmatpush1.msra.mxu0 %v448
    %461 = vmatprep.subr.mxu0 0.0
    %462 = vmatpush1.msra.mxu0 %v450
    %463 = vmatprep.subr.mxu0 0.0
    %464 = vmatpush1.msra.mxu0 0.0
    %465 = vmatprep.subr.mxu0 0.0
    %466 = vmatpush1.msra.mxu0 0.0
    %467 = vmatprep.subr.mxu0 0.0
    %468 = vmatpush1.msra.mxu0 0.0
    %469 = vmatprep.subr.mxu0 0.0
    %470 = vmatpush1.msra.mxu0 0.0
    %471 = vmatprep.subr.mxu0 0.0
    %472 = vmatpush1.msra.mxu0 0.0
    %473 = vmatprep.subr.mxu0 0.0
    %474 = vmatpush1.msra.mxu0 0.0
    %475 = vmatprep.subr.mxu0 0.0
    %476 = vmatpush1.msra.mxu0 0.0
    %477 = vmatprep.subr.mxu0 0.0
    %478 = vmatpush1.msra.mxu0 0.0
    %479 = vmatprep.subr.mxu0 0.0
    %480 = vmatpush1.msra.mxu0 0.0
    %481 = vmatprep.subr.mxu0 0.0
    %482 = vmatpush1.msra.mxu0 0.0
    %483 = vmatprep.subr.mxu0 0.0
    %484 = vmatpush1.msra.mxu0 0.0
    %485 = vmatprep.subr.mxu0 0.0
    %486 = vmatpush1.msra.mxu0 0.0
    %487 = vmatprep.subr.mxu0 0.0
    %488 = vmatpush1.msra.mxu0 0.0
    %489 = vmatprep.subr.mxu0 0.0
    %490 = vmatpush1.msra.mxu0 0.0
    %491 = vmatprep.subr.mxu0 0.0
    %492 = vmatpush1.msra.mxu0 0.0
    %493 = vmatprep.subr.mxu0 0.0
    %494 = vmatpush1.msra.mxu0 0.0
    %495 = vmatprep.subr.mxu0 0.0
    %496 = vmatpush1.msra.mxu0 0.0
    %497 = vmatprep.subr.mxu0 0.0
    %498 = vmatpush1.msra.mxu0 0.0
    %499 = vmatprep.subr.mxu0 0.0
    %500 = vmatpush1.msra.mxu0 0.0
    %501 = vmatprep.subr.mxu0 0.0
    %502 = vmatpush1.msra.mxu0 0.0
    %503 = vmatprep.subr.mxu0 0.0
    %504 = vmatpush1.msra.mxu0 0.0
    %505 = vmatprep.subr.mxu0 0.0
    %506 = vmatpush1.msra.mxu0 0.0
    %507 = vmatprep.subr.mxu0 0.0
    %508 = vmatpush1.msra.mxu0 0.0
    %509 = vmatprep.subr.mxu0 0.0
    %510 = vmatpush1.msra.mxu0 0.0
    %511 = vmatprep.subr.mxu0 0.0
    %512 = vmatpush1.msra.mxu0 0.0
    %513 = vmatprep.subr.mxu0 0.0
    %514 = vmatpush1.msra.mxu0 0.0
    %515 = vmatprep.subr.mxu0 0.0
    %516 = vmatpush1.msra.mxu0 0.0
    %517 = vmatprep.subr.mxu0 0.0
    %518 = vmatpush1.msra.mxu0 0.0
    %519 = vmatprep.subr.mxu0 0.0
    %520 = vmatpush1.msra.mxu0 0.0
    %521 = vmatprep.subr.mxu0 0.0
    %522 = vmatpush1.msra.mxu0 0.0
    %523 = vmatprep.mubr.f32.mxu0 0.0
    %524 = vmatmul.mubr.f32.gmra.mrb[0].mxu0 %v454
    %v525 = vpop.f32.mrb[0].mxu0
    %v526 = vadd.f32 0.0, %v525
    %v527 = vpop.f32.mrb[0].mxu0
    %528 = vmatprep.mubr.f32.mxu0 0.0
    %529 = vmatmul.mubr.f32.gmra.mrb[0].mxu0 %v457
    %v530 = vpop.f32.mrb[0].mxu0
    %v531 = vadd.f32 0.0, %v530
    %v532 = vpop.f32.mrb[0].mxu0
    %533 = vdwg.mxu0
    %v534 = vpack.c.bf16 %v531, %v526
    %s535 = scalar_lea.vmem %s4, 4
    %v536 = vld [vmem:[%s535] sm:$0xf]
    %v538 = vsel %vm126, %v534, 0
    %vm540 = vcmask 1043456
    %v542 = vsel %vm540, %v536, 0
    %544 = vmatprep.subr.bf16.mxu0 0
    %545 = vmatpush1.bf16.msra.mxu0 %v542
    %546 = vmatprep.subr.bf16.mxu0 0
    %547 = vmatpush1.bf16.msra.mxu0 0
    %548 = vmatprep.subr.bf16.mxu0 0
    %549 = vmatpush1.bf16.msra.mxu0 0
    %550 = vmatprep.subr.bf16.mxu0 0
    %551 = vmatpush1.bf16.msra.mxu0 0
    %552 = vmatprep.subr.bf16.mxu0 0
    %553 = vmatpush1.bf16.msra.mxu0 0
    %554 = vmatprep.subr.bf16.mxu0 0
    %555 = vmatpush1.bf16.msra.mxu0 0
    %556 = vmatprep.subr.bf16.mxu0 0
    %557 = vmatpush1.bf16.msra.mxu0 0
    %558 = vmatprep.subr.bf16.mxu0 0
    %559 = vmatpush1.bf16.msra.mxu0 0
    %560 = vmatprep.subr.bf16.mxu0 0
    %561 = vmatpush1.bf16.msra.mxu0 0
    %562 = vmatprep.subr.bf16.mxu0 0
    %563 = vmatpush1.bf16.msra.mxu0 0
    %564 = vmatprep.subr.bf16.mxu0 0
    %565 = vmatpush1.bf16.msra.mxu0 0
    %566 = vmatprep.subr.bf16.mxu0 0
    %567 = vmatpush1.bf16.msra.mxu0 0
    %568 = vmatprep.subr.bf16.mxu0 0
    %569 = vmatpush1.bf16.msra.mxu0 0
    %570 = vmatprep.subr.bf16.mxu0 0
    %571 = vmatpush1.bf16.msra.mxu0 0
    %572 = vmatprep.subr.bf16.mxu0 0
    %573 = vmatpush1.bf16.msra.mxu0 0
    %574 = vmatprep.subr.bf16.mxu0 0
    %575 = vmatpush1.bf16.msra.mxu0 0
    %576 = vmatprep.mubr.bf16.mxu0 0
    %577 = vmatmul.mubr.bf16.gmra.mrb[0].mxu0 %v538
    %v578 = vpop.f32.mrb[0].mxu0
    %v579 = vadd.f32 0.0, %v578
    %v580 = vpop.f32.mrb[0].mxu0
    %v581 = vpop.f32.mrb[0].mxu0
    %v582 = vadd.f32 0.0, %v581
    %v583 = vpop.f32.mrb[0].mxu0
    %584 = vdwg.mxu0
    %v586 = vsel %vm126, %v326, 0
    %v589 = vsel %vm540, %v327, 0
    %591 = vmatprep.subr.bf16.mxu0 0
    %592 = vmatpush1.bf16.msra.mxu0 %v589
    %593 = vmatprep.subr.bf16.mxu0 0
    %594 = vmatpush1.bf16.msra.mxu0 0
    %595 = vmatprep.subr.bf16.mxu0 0
    %596 = vmatpush1.bf16.msra.mxu0 0
    %597 = vmatprep.subr.bf16.mxu0 0
    %598 = vmatpush1.bf16.msra.mxu0 0
    %599 = vmatprep.subr.bf16.mxu0 0
    %600 = vmatpush1.bf16.msra.mxu0 0
    %601 = vmatprep.subr.bf16.mxu0 0
    %602 = vmatpush1.bf16.msra.mxu0 0
    %603 = vmatprep.subr.bf16.mxu0 0
    %604 = vmatpush1.bf16.msra.mxu0 0
    %605 = vmatprep.subr.bf16.mxu0 0
    %606 = vmatpush1.bf16.msra.mxu0 0
    %607 = vmatprep.subr.bf16.mxu0 0
    %608 = vmatpush1.bf16.msra.mxu0 0
    %609 = vmatprep.subr.bf16.mxu0 0
    %610 = vmatpush1.bf16.msra.mxu0 0
    %611 = vmatprep.subr.bf16.mxu0 0
    %612 = vmatpush1.bf16.msra.mxu0 0
    %613 = vmatprep.subr.bf16.mxu0 0
    %614 = vmatpush1.bf16.msra.mxu0 0
    %615 = vmatprep.subr.bf16.mxu0 0
    %616 = vmatpush1.bf16.msra.mxu0 0
    %617 = vmatprep.subr.bf16.mxu0 0
    %618 = vmatpush1.bf16.msra.mxu0 0
    %619 = vmatprep.subr.bf16.mxu0 0
    %620 = vmatpush1.bf16.msra.mxu0 0
    %621 = vmatprep.subr.bf16.mxu0 0
    %622 = vmatpush1.bf16.msra.mxu0 0
    %623 = vmatprep.mubr.bf16.mxu0 0
    %624 = vmatmul.mubr.bf16.gmra.mrb[0].mxu0 %v586
    %v625 = vpop.f32.mrb[0].mxu0
    %v626 = vadd.f32 %v579, %v625
    %v627 = vpop.f32.mrb[0].mxu0
    %v628 = vpop.f32.mrb[0].mxu0
    %v629 = vadd.f32 %v582, %v628
    %v630 = vpop.f32.mrb[0].mxu0
    %631 = vdwg.mxu0
    %632 = vrot.lane.b32.xlu0 %v110, 112
    %v633 = vpop.permute.xlu0 %632
    %634 = vrot.lane.b32.xlu0 %v113, 112
    %v635 = vpop.permute.xlu0 %634
    %636 = vrot.lane.b32.xlu0 %v110, 80
    %v637 = vpop.permute.xlu0 %636
    %638 = vrot.lane.b32.xlu0 %v113, 80
    %v639 = vpop.permute.xlu0 %638
    %v640 = vsel %vm126, %v633, 0
    %v642 = vsel %vm126, %v635, 0
    %v644 = vsel %vm126, %v637, 0
    %v646 = vsel %vm126, %v639, 0
    %648 = vmatprep.subr.mxu0 0.0
    %649 = vmatpush1.xpose.msra.mxu0 %v644
    %650 = vmatprep.subr.mxu0 0.0
    %651 = vmatpush1.xpose.msra.mxu0 %v646
    %652 = vmatprep.subr.mxu0 0.0
    %653 = vmatpush1.xpose.msra.mxu0 0.0
    %654 = vmatprep.subr.mxu0 0.0
    %655 = vmatpush1.xpose.msra.mxu0 0.0
    %656 = vmatprep.subr.mxu0 0.0
    %657 = vmatpush1.xpose.msra.mxu0 0.0
    %658 = vmatprep.subr.mxu0 0.0
    %659 = vmatpush1.xpose.msra.mxu0 0.0
    %660 = vmatprep.subr.mxu0 0.0
    %661 = vmatpush1.xpose.msra.mxu0 0.0
    %662 = vmatprep.subr.mxu0 0.0
    %663 = vmatpush1.xpose.msra.mxu0 0.0
    %664 = vmatprep.subr.mxu0 0.0
    %665 = vmatpush1.xpose.msra.mxu0 0.0
    %666 = vmatprep.subr.mxu0 0.0
    %667 = vmatpush1.xpose.msra.mxu0 0.0
    %668 = vmatprep.subr.mxu0 0.0
    %669 = vmatpush1.xpose.msra.mxu0 0.0
    %670 = vmatprep.subr.mxu0 0.0
    %671 = vmatpush1.xpose.msra.mxu0 0.0
    %672 = vmatprep.subr.mxu0 0.0
    %673 = vmatpush1.xpose.msra.mxu0 0.0
    %674 = vmatprep.subr.mxu0 0.0
    %675 = vmatpush1.xpose.msra.mxu0 0.0
    %676 = vmatprep.subr.mxu0 0.0
    %677 = vmatpush1.xpose.msra.mxu0 0.0
    %678 = vmatprep.subr.mxu0 0.0
    %679 = vmatpush1.xpose.msra.mxu0 0.0
    %680 = vmatprep.subr.mxu0 0.0
    %681 = vmatpush1.xpose.msra.mxu0 0.0
    %682 = vmatprep.subr.mxu0 0.0
    %683 = vmatpush1.xpose.msra.mxu0 0.0
    %684 = vmatprep.subr.mxu0 0.0
    %685 = vmatpush1.xpose.msra.mxu0 0.0
    %686 = vmatprep.subr.mxu0 0.0
    %687 = vmatpush1.xpose.msra.mxu0 0.0
    %688 = vmatprep.subr.mxu0 0.0
    %689 = vmatpush1.xpose.msra.mxu0 0.0
    %690 = vmatprep.subr.mxu0 0.0
    %691 = vmatpush1.xpose.msra.mxu0 0.0
    %692 = vmatprep.subr.mxu0 0.0
    %693 = vmatpush1.xpose.msra.mxu0 0.0
    %694 = vmatprep.subr.mxu0 0.0
    %695 = vmatpush1.xpose.msra.mxu0 0.0
    %696 = vmatprep.subr.mxu0 0.0
    %697 = vmatpush1.xpose.msra.mxu0 0.0
    %698 = vmatprep.subr.mxu0 0.0
    %699 = vmatpush1.xpose.msra.mxu0 0.0
    %700 = vmatprep.subr.mxu0 0.0
    %701 = vmatpush1.xpose.msra.mxu0 0.0
    %702 = vmatprep.subr.mxu0 0.0
    %703 = vmatpush1.xpose.msra.mxu0 0.0
    %704 = vmatprep.subr.mxu0 0.0
    %705 = vmatpush1.xpose.msra.mxu0 0.0
    %706 = vmatprep.subr.mxu0 0.0
    %707 = vmatpush1.xpose.msra.mxu0 0.0
    %708 = vmatprep.subr.mxu0 0.0
    %709 = vmatpush1.xpose.msra.mxu0 0.0
    %710 = vmatprep.subr.mxu0 0.0
    %711 = vmatpush1.xpose.msra.mxu0 0.0
    %712 = vmatprep.mubr.f32.mxu0 0.0
    %713 = vmatmul.mubr.f32.gmra.mrb[0].mxu0 %v640
    %v714 = vpop.f32.mrb[0].mxu0
    %v715 = vadd.f32 0.0, %v714
    %v716 = vpop.f32.mrb[0].mxu0
    %717 = vmatprep.mubr.f32.mxu0 0.0
    %718 = vmatmul.mubr.f32.gmra.mrb[0].mxu0 %v642
    %v719 = vpop.f32.mrb[0].mxu0
    %v720 = vadd.f32 0.0, %v719
    %v721 = vpop.f32.mrb[0].mxu0
    %722 = vdwg.mxu0
    %v723 = vmul.f32 %v715, 0.35355338
    %v724 = vmul.f32 %v720, 0.35355338
    %v725 = vadd.f32 %v723, %v118
    %v726 = vadd.f32 %v724, %v119
    %v727 = vsel %vm214, %v725, -inf
    %728 = vmax.xlane.f32.xlu0 %v727
    %v729 = vpop.xlane.xlu0 %728
    %v730 = vsel %vm214, %v726, -inf
    %731 = vmax.xlane.f32.xlu0 %v730
    %v732 = vpop.xlane.xlu0 %731
    %v733 = vsub.f32 %v725, %v729
    %v734 = vsub.f32 %v726, %v732
    %v735 = vmul.f32 %v733, 1.442695
    %v736 = vpow.pop %v735
    %v737 = vmul.f32 %v734, 1.442695
    %v738 = vpow.pop %v737
    %v739 = vsel %vm214, %v736, 0.0
    %740 = vadd.xlane.f32.xlu0 %v739
    %v741 = vpop.xlane.xlu0 %740
    %v742 = vsel %vm214, %v738, 0.0
    %743 = vadd.xlane.f32.xlu0 %v742
    %v744 = vpop.xlane.xlu0 %743
    %v745 = vrcp.pop %v741
    %v746 = vrcp.pop %v744
    %v747 = vmul.f32 %v736, %v745
    %v748 = vmul.f32 %v738, %v746
    %v749 = vmul.f32 %v747, %v45
    %v750 = vmul.f32 %v748, %v46
    %751 = vrot.lane.b32.xlu0 %v110, 48
    %v752 = vpop.permute.xlu0 %751
    %753 = vrot.lane.b32.xlu0 %v113, 48
    %v754 = vpop.permute.xlu0 %753
    %v758 = vsel %vm214, %v749, 0
    %v761 = vsel %vm214, %v750, 0
    %763 = vmatprep.subr.mxu0 0.0
    %764 = vmatpush1.msra.mxu0 %v752
    %765 = vmatprep.subr.mxu0 0.0
    %766 = vmatpush1.msra.mxu0 %v754
    %767 = vmatprep.subr.mxu0 0.0
    %768 = vmatpush1.msra.mxu0 0.0
    %769 = vmatprep.subr.mxu0 0.0
    %770 = vmatpush1.msra.mxu0 0.0
    %771 = vmatprep.subr.mxu0 0.0
    %772 = vmatpush1.msra.mxu0 0.0
    %773 = vmatprep.subr.mxu0 0.0
    %774 = vmatpush1.msra.mxu0 0.0
    %775 = vmatprep.subr.mxu0 0.0
    %776 = vmatpush1.msra.mxu0 0.0
    %777 = vmatprep.subr.mxu0 0.0
    %778 = vmatpush1.msra.mxu0 0.0
    %779 = vmatprep.subr.mxu0 0.0
    %780 = vmatpush1.msra.mxu0 0.0
    %781 = vmatprep.subr.mxu0 0.0
    %782 = vmatpush1.msra.mxu0 0.0
    %783 = vmatprep.subr.mxu0 0.0
    %784 = vmatpush1.msra.mxu0 0.0
    %785 = vmatprep.subr.mxu0 0.0
    %786 = vmatpush1.msra.mxu0 0.0
    %787 = vmatprep.subr.mxu0 0.0
    %788 = vmatpush1.msra.mxu0 0.0
    %789 = vmatprep.subr.mxu0 0.0
    %790 = vmatpush1.msra.mxu0 0.0
    %791 = vmatprep.subr.mxu0 0.0
    %792 = vmatpush1.msra.mxu0 0.0
    %793 = vmatprep.subr.mxu0 0.0
    %794 = vmatpush1.msra.mxu0 0.0
    %795 = vmatprep.subr.mxu0 0.0
    %796 = vmatpush1.msra.mxu0 0.0
    %797 = vmatprep.subr.mxu0 0.0
    %798 = vmatpush1.msra.mxu0 0.0
    %799 = vmatprep.subr.mxu0 0.0
    %800 = vmatpush1.msra.mxu0 0.0
    %801 = vmatprep.subr.mxu0 0.0
    %802 = vmatpush1.msra.mxu0 0.0
    %803 = vmatprep.subr.mxu0 0.0
    %804 = vmatpush1.msra.mxu0 0.0
    %805 = vmatprep.subr.mxu0 0.0
    %806 = vmatpush1.msra.mxu0 0.0
    %807 = vmatprep.subr.mxu0 0.0
    %808 = vmatpush1.msra.mxu0 0.0
    %809 = vmatprep.subr.mxu0 0.0
    %810 = vmatpush1.msra.mxu0 0.0
    %811 = vmatprep.subr.mxu0 0.0
    %812 = vmatpush1.msra.mxu0 0.0
    %813 = vmatprep.subr.mxu0 0.0
    %814 = vmatpush1.msra.mxu0 0.0
    %815 = vmatprep.subr.mxu0 0.0
    %816 = vmatpush1.msra.mxu0 0.0
    %817 = vmatprep.subr.mxu0 0.0
    %818 = vmatpush1.msra.mxu0 0.0
    %819 = vmatprep.subr.mxu0 0.0
    %820 = vmatpush1.msra.mxu0 0.0
    %821 = vmatprep.subr.mxu0 0.0
    %822 = vmatpush1.msra.mxu0 0.0
    %823 = vmatprep.subr.mxu0 0.0
    %824 = vmatpush1.msra.mxu0 0.0
    %825 = vmatprep.subr.mxu0 0.0
    %826 = vmatpush1.msra.mxu0 0.0
    %827 = vmatprep.mubr.f32.mxu0 0.0
    %828 = vmatmul.mubr.f32.gmra.mrb[0].mxu0 %v758
    %v829 = vpop.f32.mrb[0].mxu0
    %v830 = vadd.f32 0.0, %v829
    %v831 = vpop.f32.mrb[0].mxu0
    %832 = vmatprep.mubr.f32.mxu0 0.0
    %833 = vmatmul.mubr.f32.gmra.mrb[0].mxu0 %v761
    %v834 = vpop.f32.mrb[0].mxu0
    %v835 = vadd.f32 0.0, %v834
    %v836 = vpop.f32.mrb[0].mxu0
    %837 = vdwg.mxu0
    %v838 = vpack.c.bf16 %v835, %v830
    %s839 = scalar_lea.vmem %s4, 8
    %v840 = vld [vmem:[%s839] sm:$0xf]
    %v842 = vsel %vm126, %v838, 0
    %v845 = vsel %vm540, %v840, 0
    %847 = vmatprep.subr.bf16.mxu0 0
    %848 = vmatpush1.bf16.msra.mxu0 %v845
    %849 = vmatprep.subr.bf16.mxu0 0
    %850 = vmatpush1.bf16.msra.mxu0 0
    %851 = vmatprep.subr.bf16.mxu0 0
    %852 = vmatpush1.bf16.msra.mxu0 0
    %853 = vmatprep.subr.bf16.mxu0 0
    %854 = vmatpush1.bf16.msra.mxu0 0
    %855 = vmatprep.subr.bf16.mxu0 0
    %856 = vmatpush1.bf16.msra.mxu0 0
    %857 = vmatprep.subr.bf16.mxu0 0
    %858 = vmatpush1.bf16.msra.mxu0 0
    %859 = vmatprep.subr.bf16.mxu0 0
    %860 = vmatpush1.bf16.msra.mxu0 0
    %861 = vmatprep.subr.bf16.mxu0 0
    %862 = vmatpush1.bf16.msra.mxu0 0
    %863 = vmatprep.subr.bf16.mxu0 0
    %864 = vmatpush1.bf16.msra.mxu0 0
    %865 = vmatprep.subr.bf16.mxu0 0
    %866 = vmatpush1.bf16.msra.mxu0 0
    %867 = vmatprep.subr.bf16.mxu0 0
    %868 = vmatpush1.bf16.msra.mxu0 0
    %869 = vmatprep.subr.bf16.mxu0 0
    %870 = vmatpush1.bf16.msra.mxu0 0
    %871 = vmatprep.subr.bf16.mxu0 0
    %872 = vmatpush1.bf16.msra.mxu0 0
    %873 = vmatprep.subr.bf16.mxu0 0
    %874 = vmatpush1.bf16.msra.mxu0 0
    %875 = vmatprep.subr.bf16.mxu0 0
    %876 = vmatpush1.bf16.msra.mxu0 0
    %877 = vmatprep.subr.bf16.mxu0 0
    %878 = vmatpush1.bf16.msra.mxu0 0
    %879 = vmatprep.mubr.bf16.mxu0 0
    %880 = vmatmul.mubr.bf16.gmra.mrb[0].mxu0 %v842
    %v881 = vpop.f32.mrb[0].mxu0
    %v882 = vadd.f32 0.0, %v881
    %v883 = vpop.f32.mrb[0].mxu0
    %v884 = vpop.f32.mrb[0].mxu0
    %v885 = vadd.f32 0.0, %v884
    %v886 = vpop.f32.mrb[0].mxu0
    %887 = vdwg.mxu0
    %v888 = vadd.f32 %v626, %v882
    %v889 = vadd.f32 %v629, %v885
    %890 = vrot.lane.b32.xlu0 %v110, 104
    %v891 = vpop.permute.xlu0 %890
    %892 = vrot.lane.b32.xlu0 %v113, 104
    %v893 = vpop.permute.xlu0 %892
    %894 = vrot.lane.b32.xlu0 %v110, 72
    %v895 = vpop.permute.xlu0 %894
    %896 = vrot.lane.b32.xlu0 %v113, 72
    %v897 = vpop.permute.xlu0 %896
    %v898 = vsel %vm126, %v891, 0
    %v900 = vsel %vm126, %v893, 0
    %v902 = vsel %vm126, %v895, 0
    %v904 = vsel %vm126, %v897, 0
    %906 = vmatprep.subr.mxu0 0.0
    %907 = vmatpush1.xpose.msra.mxu0 %v902
    %908 = vmatprep.subr.mxu0 0.0
    %909 = vmatpush1.xpose.msra.mxu0 %v904
    %910 = vmatprep.subr.mxu0 0.0
    %911 = vmatpush1.xpose.msra.mxu0 0.0
    %912 = vmatprep.subr.mxu0 0.0
    %913 = vmatpush1.xpose.msra.mxu0 0.0
    %914 = vmatprep.subr.mxu0 0.0
    %915 = vmatpush1.xpose.msra.mxu0 0.0
    %916 = vmatprep.subr.mxu0 0.0
    %917 = vmatpush1.xpose.msra.mxu0 0.0
    %918 = vmatprep.subr.mxu0 0.0
    %919 = vmatpush1.xpose.msra.mxu0 0.0
    %920 = vmatprep.subr.mxu0 0.0
    %921 = vmatpush1.xpose.msra.mxu0 0.0
    %922 = vmatprep.subr.mxu0 0.0
    %923 = vmatpush1.xpose.msra.mxu0 0.0
    %924 = vmatprep.subr.mxu0 0.0
    %925 = vmatpush1.xpose.msra.mxu0 0.0
    %926 = vmatprep.subr.mxu0 0.0
    %927 = vmatpush1.xpose.msra.mxu0 0.0
    %928 = vmatprep.subr.mxu0 0.0
    %929 = vmatpush1.xpose.msra.mxu0 0.0
    %930 = vmatprep.subr.mxu0 0.0
    %931 = vmatpush1.xpose.msra.mxu0 0.0
    %932 = vmatprep.subr.mxu0 0.0
    %933 = vmatpush1.xpose.msra.mxu0 0.0
    %934 = vmatprep.subr.mxu0 0.0
    %935 = vmatpush1.xpose.msra.mxu0 0.0
    %936 = vmatprep.subr.mxu0 0.0
    %937 = vmatpush1.xpose.msra.mxu0 0.0
    %938 = vmatprep.subr.mxu0 0.0
    %939 = vmatpush1.xpose.msra.mxu0 0.0
    %940 = vmatprep.subr.mxu0 0.0
    %941 = vmatpush1.xpose.msra.mxu0 0.0
    %942 = vmatprep.subr.mxu0 0.0
    %943 = vmatpush1.xpose.msra.mxu0 0.0
    %944 = vmatprep.subr.mxu0 0.0
    %945 = vmatpush1.xpose.msra.mxu0 0.0
    %946 = vmatprep.subr.mxu0 0.0
    %947 = vmatpush1.xpose.msra.mxu0 0.0
    %948 = vmatprep.subr.mxu0 0.0
    %949 = vmatpush1.xpose.msra.mxu0 0.0
    %950 = vmatprep.subr.mxu0 0.0
    %951 = vmatpush1.xpose.msra.mxu0 0.0
    %952 = vmatprep.subr.mxu0 0.0
    %953 = vmatpush1.xpose.msra.mxu0 0.0
    %954 = vmatprep.subr.mxu0 0.0
    %955 = vmatpush1.xpose.msra.mxu0 0.0
    %956 = vmatprep.subr.mxu0 0.0
    %957 = vmatpush1.xpose.msra.mxu0 0.0
    %958 = vmatprep.subr.mxu0 0.0
    %959 = vmatpush1.xpose.msra.mxu0 0.0
    %960 = vmatprep.subr.mxu0 0.0
    %961 = vmatpush1.xpose.msra.mxu0 0.0
    %962 = vmatprep.subr.mxu0 0.0
    %963 = vmatpush1.xpose.msra.mxu0 0.0
    %964 = vmatprep.subr.mxu0 0.0
    %965 = vmatpush1.xpose.msra.mxu0 0.0
    %966 = vmatprep.subr.mxu0 0.0
    %967 = vmatpush1.xpose.msra.mxu0 0.0
    %968 = vmatprep.subr.mxu0 0.0
    %969 = vmatpush1.xpose.msra.mxu0 0.0
    %970 = vmatprep.mubr.f32.mxu0 0.0
    %971 = vmatmul.mubr.f32.gmra.mrb[0].mxu0 %v898
    %v972 = vpop.f32.mrb[0].mxu0
    %v973 = vadd.f32 0.0, %v972
    %v974 = vpop.f32.mrb[0].mxu0
    %975 = vmatprep.mubr.f32.mxu0 0.0
    %976 = vmatmul.mubr.f32.gmra.mrb[0].mxu0 %v900
    %v977 = vpop.f32.mrb[0].mxu0
    %v978 = vadd.f32 0.0, %v977
    %v979 = vpop.f32.mrb[0].mxu0
    %980 = vdwg.mxu0
    %v981 = vmul.f32 %v973, 0.35355338
    %v982 = vmul.f32 %v978, 0.35355338
    %v983 = vadd.f32 %v981, %v118
    %v984 = vadd.f32 %v982, %v119
    %v985 = vsel %vm214, %v983, -inf
    %986 = vmax.xlane.f32.xlu0 %v985
    %v987 = vpop.xlane.xlu0 %986
    %v988 = vsel %vm214, %v984, -inf
    %989 = vmax.xlane.f32.xlu0 %v988
    %v990 = vpop.xlane.xlu0 %989
    %v991 = vsub.f32 %v983, %v987
    %v992 = vsub.f32 %v984, %v990
    %v993 = vmul.f32 %v991, 1.442695
    %v994 = vpow.pop %v993
    %v995 = vmul.f32 %v992, 1.442695
    %v996 = vpow.pop %v995
    %v997 = vsel %vm214, %v994, 0.0
    %998 = vadd.xlane.f32.xlu0 %v997
    %v999 = vpop.xlane.xlu0 %998
    %v1000 = vsel %vm214, %v996, 0.0
    %1001 = vadd.xlane.f32.xlu0 %v1000
    %v1002 = vpop.xlane.xlu0 %1001
    %v1003 = vrcp.pop %v999
    %v1004 = vrcp.pop %v1002
    %v1005 = vmul.f32 %v994, %v1003
    %v1006 = vmul.f32 %v996, %v1004
    %v1007 = vmul.f32 %v1005, %v45
    %v1008 = vmul.f32 %v1006, %v46
    %1009 = vrot.lane.b32.xlu0 %v110, 40
    %v1010 = vpop.permute.xlu0 %1009
    %1011 = vrot.lane.b32.xlu0 %v113, 40
    %v1012 = vpop.permute.xlu0 %1011
    %v1016 = vsel %vm214, %v1007, 0
    %v1019 = vsel %vm214, %v1008, 0
    %1021 = vmatprep.subr.mxu0 0.0
    %1022 = vmatpush1.msra.mxu0 %v1010
    %1023 = vmatprep.subr.mxu0 0.0
    %1024 = vmatpush1.msra.mxu0 %v1012
    %1025 = vmatprep.subr.mxu0 0.0
    %1026 = vmatpush1.msra.mxu0 0.0
    %1027 = vmatprep.subr.mxu0 0.0
    %1028 = vmatpush1.msra.mxu0 0.0
    %1029 = vmatprep.subr.mxu0 0.0
    %1030 = vmatpush1.msra.mxu0 0.0
    %1031 = vmatprep.subr.mxu0 0.0
    %1032 = vmatpush1.msra.mxu0 0.0
    %1033 = vmatprep.subr.mxu0 0.0
    %1034 = vmatpush1.msra.mxu0 0.0
    %1035 = vmatprep.subr.mxu0 0.0
    %1036 = vmatpush1.msra.mxu0 0.0
    %1037 = vmatprep.subr.mxu0 0.0
    %1038 = vmatpush1.msra.mxu0 0.0
    %1039 = vmatprep.subr.mxu0 0.0
    %1040 = vmatpush1.msra.mxu0 0.0
    %1041 = vmatprep.subr.mxu0 0.0
    %1042 = vmatpush1.msra.mxu0 0.0
    %1043 = vmatprep.subr.mxu0 0.0
    %1044 = vmatpush1.msra.mxu0 0.0
    %1045 = vmatprep.subr.mxu0 0.0
    %1046 = vmatpush1.msra.mxu0 0.0
    %1047 = vmatprep.subr.mxu0 0.0
    %1048 = vmatpush1.msra.mxu0 0.0
    %1049 = vmatprep.subr.mxu0 0.0
    %1050 = vmatpush1.msra.mxu0 0.0
    %1051 = vmatprep.subr.mxu0 0.0
    %1052 = vmatpush1.msra.mxu0 0.0
    %1053 = vmatprep.subr.mxu0 0.0
    %1054 = vmatpush1.msra.mxu0 0.0
    %1055 = vmatprep.subr.mxu0 0.0
    %1056 = vmatpush1.msra.mxu0 0.0
    %1057 = vmatprep.subr.mxu0 0.0
    %1058 = vmatpush1.msra.mxu0 0.0
    %1059 = vmatprep.subr.mxu0 0.0
    %1060 = vmatpush1.msra.mxu0 0.0
    %1061 = vmatprep.subr.mxu0 0.0
    %1062 = vmatpush1.msra.mxu0 0.0
    %1063 = vmatprep.subr.mxu0 0.0
    %1064 = vmatpush1.msra.mxu0 0.0
    %1065 = vmatprep.subr.mxu0 0.0
    %1066 = vmatpush1.msra.mxu0 0.0
    %1067 = vmatprep.subr.mxu0 0.0
    %1068 = vmatpush1.msra.mxu0 0.0
    %1069 = vmatprep.subr.mxu0 0.0
    %1070 = vmatpush1.msra.mxu0 0.0
    %1071 = vmatprep.subr.mxu0 0.0
    %1072 = vmatpush1.msra.mxu0 0.0
    %1073 = vmatprep.subr.mxu0 0.0
    %1074 = vmatpush1.msra.mxu0 0.0
    %1075 = vmatprep.subr.mxu0 0.0
    %1076 = vmatpush1.msra.mxu0 0.0
    %1077 = vmatprep.subr.mxu0 0.0
    %1078 = vmatpush1.msra.mxu0 0.0
    %1079 = vmatprep.subr.mxu0 0.0
    %1080 = vmatpush1.msra.mxu0 0.0
    %1081 = vmatprep.subr.mxu0 0.0
    %1082 = vmatpush1.msra.mxu0 0.0
    %1083 = vmatprep.subr.mxu0 0.0
    %1084 = vmatpush1.msra.mxu0 0.0
    %1085 = vmatprep.mubr.f32.mxu0 0.0
    %1086 = vmatmul.mubr.f32.gmra.mrb[0].mxu0 %v1016
    %v1087 = vpop.f32.mrb[0].mxu0
    %v1088 = vadd.f32 0.0, %v1087
    %v1089 = vpop.f32.mrb[0].mxu0
    %1090 = vmatprep.mubr.f32.mxu0 0.0
    %1091 = vmatmul.mubr.f32.gmra.mrb[0].mxu0 %v1019
    %v1092 = vpop.f32.mrb[0].mxu0
    %v1093 = vadd.f32 0.0, %v1092
    %v1094 = vpop.f32.mrb[0].mxu0
    %1095 = vdwg.mxu0
    %v1096 = vpack.c.bf16 %v1093, %v1088
    %s1097 = scalar_lea.vmem %s4, 12
    %v1098 = vld [vmem:[%s1097] sm:$0xf]
    %v1100 = vsel %vm126, %v1096, 0
    %v1103 = vsel %vm540, %v1098, 0
    %1105 = vmatprep.subr.bf16.mxu0 0
    %1106 = vmatpush1.bf16.msra.mxu0 %v1103
    %1107 = vmatprep.subr.bf16.mxu0 0
    %1108 = vmatpush1.bf16.msra.mxu0 0
    %1109 = vmatprep.subr.bf16.mxu0 0
    %1110 = vmatpush1.bf16.msra.mxu0 0
    %1111 = vmatprep.subr.bf16.mxu0 0
    %1112 = vmatpush1.bf16.msra.mxu0 0
    %1113 = vmatprep.subr.bf16.mxu0 0
    %1114 = vmatpush1.bf16.msra.mxu0 0
    %1115 = vmatprep.subr.bf16.mxu0 0
    %1116 = vmatpush1.bf16.msra.mxu0 0
    %1117 = vmatprep.subr.bf16.mxu0 0
    %1118 = vmatpush1.bf16.msra.mxu0 0
    %1119 = vmatprep.subr.bf16.mxu0 0
    %1120 = vmatpush1.bf16.msra.mxu0 0
    %1121 = vmatprep.subr.bf16.mxu0 0
    %1122 = vmatpush1.bf16.msra.mxu0 0
    %1123 = vmatprep.subr.bf16.mxu0 0
    %1124 = vmatpush1.bf16.msra.mxu0 0
    %1125 = vmatprep.subr.bf16.mxu0 0
    %1126 = vmatpush1.bf16.msra.mxu0 0
    %1127 = vmatprep.subr.bf16.mxu0 0
    %1128 = vmatpush1.bf16.msra.mxu0 0
    %1129 = vmatprep.subr.bf16.mxu0 0
    %1130 = vmatpush1.bf16.msra.mxu0 0
    %1131 = vmatprep.subr.bf16.mxu0 0
    %1132 = vmatpush1.bf16.msra.mxu0 0
    %1133 = vmatprep.subr.bf16.mxu0 0
    %1134 = vmatpush1.bf16.msra.mxu0 0
    %1135 = vmatprep.subr.bf16.mxu0 0
    %1136 = vmatpush1.bf16.msra.mxu0 0
    %1137 = vmatprep.mubr.bf16.mxu0 0
    %1138 = vmatmul.mubr.bf16.gmra.mrb[0].mxu0 %v1100
    %v1139 = vpop.f32.mrb[0].mxu0
    %v1140 = vadd.f32 0.0, %v1139
    %v1141 = vpop.f32.mrb[0].mxu0
    %v1142 = vpop.f32.mrb[0].mxu0
    %v1143 = vadd.f32 0.0, %v1142
    %v1144 = vpop.f32.mrb[0].mxu0
    %1145 = vdwg.mxu0
    %v1146 = vadd.f32 %v888, %v1140
    %v1147 = vadd.f32 %v889, %v1143
    %v1148 = vld [vmem:[%s5] sm:$0x1]
    %v1150 = vlaneseq
    %v1151 = vshrl.u32 %v1150, 7
    %v1152 = vsub.s32 0, %v1151
    %v1153 = vrot.slane %v1148, %v1152
    %v1155 = vadd.f32 %v1146, %v1153
    %v1156 = vadd.f32 %v1147, %v1153
    %v1157 = vld [vmem:[%s10] sm:$0x1]
    %v1159 = vlaneseq
    %v1160 = vshrl.u32 %v1159, 7
    %v1161 = vsub.s32 0, %v1160
    %v1162 = vrot.slane %v1157, %v1161
    %v1164 = vld [vmem:[%s11] sm:$0x1]
    %v1166 = vlaneseq
    %v1167 = vshrl.u32 %v1166, 7
    %v1168 = vsub.s32 0, %v1167
    %v1169 = vrot.slane %v1164, %v1168
    %v1171 = vsel %vm71, %v1155, 0.0
    %1172 = vadd.xlane.f32.xlu0 %v1171
    %v1173 = vpop.xlane.xlu0 %1172
    %v1174 = vsel %vm71, %v1156, 0.0
    %1175 = vadd.xlane.f32.xlu0 %v1174
    %v1176 = vpop.xlane.xlu0 %1175
    %v1177 = vrcp.pop 32.0
    %v1178 = vmul.f32 %v1173, %v1177
    %v1179 = vmul.f32 %v1176, %v1177
    %v1180 = vsub.f32 %v1155, %v1178
    %v1181 = vsub.f32 %v1156, %v1179
    %v1182 = vmul.f32 %v1180, %v1180
    %v1183 = vmul.f32 %v1181, %v1181
    %v1184 = vsel %vm71, %v1182, 0.0
    %1185 = vadd.xlane.f32.xlu0 %v1184
    %v1186 = vpop.xlane.xlu0 %1185
    %v1187 = vsel %vm71, %v1183, 0.0
    %1188 = vadd.xlane.f32.xlu0 %v1187
    %v1189 = vpop.xlane.xlu0 %1188
    %v1190 = vmul.f32 %v1186, 0.032258064
    %v1191 = vmul.f32 %v1189, 0.032258064
    %v1192 = vrsqrt.pop %v1190
    %v1193 = vmul.f32 %v1190, %v1192
    %vm1194 = vcmp.eq.f32.partialorder %v1190, inf
    %v1195 = vsel %vm1194, %v1190, %v1193
    %vm1196 = vcmp.eq.f32.partialorder %v1190, 0.0
    %v1197 = vand.u32 %v1190, 2147483648
    %v1198 = vsel %vm1196, %v1197, %v1195
    %v1199 = vrsqrt.pop %v1191
    %v1200 = vmul.f32 %v1191, %v1199
    %vm1201 = vcmp.eq.f32.partialorder %v1191, inf
    %v1202 = vsel %vm1201, %v1191, %v1200
    %vm1203 = vcmp.eq.f32.partialorder %v1191, 0.0
    %v1204 = vand.u32 %v1191, 2147483648
    %v1205 = vsel %vm1203, %v1204, %v1202
    %v1206 = vmul.f32 %v1162, %v1180
    %v1207 = vmul.f32 %v1162, %v1181
    %v1208 = vadd.f32 %v1198, 1e-06
    %v1209 = vadd.f32 %v1205, 1e-06
    %v1210 = vrcp.pop %v1208
    %v1211 = vrcp.pop %v1209
    %v1212 = vmul.f32 %v1206, %v1210
    %v1213 = vmul.f32 %v1207, %v1211
    %v1214 = vadd.f32 %v1212, %v1169
    %v1215 = vadd.f32 %v1213, %v1169
    %v1216 = vadd.f32 %v43, %v1214
    %v1217 = vadd.f32 %v44, %v1215
    %v1218 = vpack.c.bf16 %v1217, %v1216
    %v1219 = vld [vmem:[%s6] sm:$0xf]
    %v1220 = vld [vmem:[%s6 + $0x4] sm:$0xf]
    %v1221 = vld [vmem:[%s6 + $0x8] sm:$0xf]
    %v1222 = vld [vmem:[%s6 + $0xc] sm:$0xf]
    %v1223 = vld [vmem:[%s7] sm:$0x1]
    %v1225 = vlaneseq
    %v1226 = vshrl.u32 %v1225, 7
    %v1227 = vsub.s32 0, %v1226
    %v1228 = vrot.slane %v1223, %v1227
    %v1234 = vunpack.c.l.b16 %v1219
    %v1235 = vunpack.c.l.b16 %v1220
    %v1236 = vunpack.c.l.b16 %v1221
    %v1237 = vunpack.c.l.b16 %v1222
    %v1238 = vpack.c.b16 %v1235, %v1234
    %v1239 = vpack.c.b16 %v1237, %v1236
    %v1243 = vsel %vm71, %v1218, 0
    %1245 = vmatprep.subr.bf16.mxu0 0
    %1246 = vmatpush1.bf16.msra.mxu0 %v1238
    %1247 = vmatprep.subr.bf16.mxu0 0
    %1248 = vmatpush1.bf16.msra.mxu0 %v1239
    %1249 = vmatprep.subr.bf16.mxu0 0
    %1250 = vmatpush1.bf16.msra.mxu0 0
    %1251 = vmatprep.subr.bf16.mxu0 0
    %1252 = vmatpush1.bf16.msra.mxu0 0
    %1253 = vmatprep.subr.bf16.mxu0 0
    %1254 = vmatpush1.bf16.msra.mxu0 0
    %1255 = vmatprep.subr.bf16.mxu0 0
    %1256 = vmatpush1.bf16.msra.mxu0 0
    %1257 = vmatprep.subr.bf16.mxu0 0
    %1258 = vmatpush1.bf16.msra.mxu0 0
    %1259 = vmatprep.subr.bf16.mxu0 0
    %1260 = vmatpush1.bf16.msra.mxu0 0
    %1261 = vmatprep.subr.bf16.mxu0 0
    %1262 = vmatpush1.bf16.msra.mxu0 0
    %1263 = vmatprep.subr.bf16.mxu0 0
    %1264 = vmatpush1.bf16.msra.mxu0 0
    %1265 = vmatprep.subr.bf16.mxu0 0
    %1266 = vmatpush1.bf16.msra.mxu0 0
    %1267 = vmatprep.subr.bf16.mxu0 0
    %1268 = vmatpush1.bf16.msra.mxu0 0
    %1269 = vmatprep.subr.bf16.mxu0 0
    %1270 = vmatpush1.bf16.msra.mxu0 0
    %1271 = vmatprep.subr.bf16.mxu0 0
    %1272 = vmatpush1.bf16.msra.mxu0 0
    %1273 = vmatprep.subr.bf16.mxu0 0
    %1274 = vmatpush1.bf16.msra.mxu0 0
    %1275 = vmatprep.subr.bf16.mxu0 0
    %1276 = vmatpush1.bf16.msra.mxu0 0
    %1277 = vmatprep.mubr.bf16.mxu0 0
    %1278 = vmatmul.mubr.bf16.gmra.mrb[0].mxu0 %v1243
    %v1279 = vpop.f32.mrb[0].mxu0
    %v1280 = vadd.f32 %v1228, %v1279
    %v1281 = vpop.f32.mrb[0].mxu0
    %v1282 = vpop.f32.mrb[0].mxu0
    %v1283 = vadd.f32 %v1228, %v1282
    %v1284 = vpop.f32.mrb[0].mxu0
    %1285 = vdwg.mxu0
    %v1286 = vpack.c.bf16 %v1283, %v1280
    %v1287 = vld [vmem:[%s8] sm:$0xf]
    %v1288 = vld [vmem:[%s8 + $0x4] sm:$0xf]
    %v1289 = vld [vmem:[%s8 + $0x8] sm:$0xf]
    %v1290 = vld [vmem:[%s8 + $0xc] sm:$0xf]
    %v1291 = vld [vmem:[%s9] sm:$0x1]
    %v1293 = vlaneseq
    %v1294 = vshrl.u32 %v1293, 7
    %v1295 = vsub.s32 0, %v1294
    %v1296 = vrot.slane %v1291, %v1295
    %v1302 = vunpack.c.l.b16 %v1287
    %v1303 = vunpack.c.l.b16 %v1288
    %v1304 = vunpack.c.l.b16 %v1289
    %v1305 = vunpack.c.l.b16 %v1290
    %v1306 = vpack.c.b16 %v1303, %v1302
    %v1307 = vpack.c.b16 %v1305, %v1304
    %v1311 = vsel %vm71, %v1286, 0
    %1313 = vmatprep.subr.bf16.mxu0 0
    %1314 = vmatpush1.bf16.msra.mxu0 %v1306
    %1315 = vmatprep.subr.bf16.mxu0 0
    %1316 = vmatpush1.bf16.msra.mxu0 %v1307
    %1317 = vmatprep.subr.bf16.mxu0 0
    %1318 = vmatpush1.bf16.msra.mxu0 0
    %1319 = vmatprep.subr.bf16.mxu0 0
    %1320 = vmatpush1.bf16.msra.mxu0 0
    %1321 = vmatprep.subr.bf16.mxu0 0
    %1322 = vmatpush1.bf16.msra.mxu0 0
    %1323 = vmatprep.subr.bf16.mxu0 0
    %1324 = vmatpush1.bf16.msra.mxu0 0
    %1325 = vmatprep.subr.bf16.mxu0 0
    %1326 = vmatpush1.bf16.msra.mxu0 0
    %1327 = vmatprep.subr.bf16.mxu0 0
    %1328 = vmatpush1.bf16.msra.mxu0 0
    %1329 = vmatprep.subr.bf16.mxu0 0
    %1330 = vmatpush1.bf16.msra.mxu0 0
    %1331 = vmatprep.subr.bf16.mxu0 0
    %1332 = vmatpush1.bf16.msra.mxu0 0
    %1333 = vmatprep.subr.bf16.mxu0 0
    %1334 = vmatpush1.bf16.msra.mxu0 0
    %1335 = vmatprep.subr.bf16.mxu0 0
    %1336 = vmatpush1.bf16.msra.mxu0 0
    %1337 = vmatprep.subr.bf16.mxu0 0
    %1338 = vmatpush1.bf16.msra.mxu0 0
    %1339 = vmatprep.subr.bf16.mxu0 0
    %1340 = vmatpush1.bf16.msra.mxu0 0
    %1341 = vmatprep.subr.bf16.mxu0 0
    %1342 = vmatpush1.bf16.msra.mxu0 0
    %1343 = vmatprep.subr.bf16.mxu0 0
    %1344 = vmatpush1.bf16.msra.mxu0 0
    %1345 = vmatprep.mubr.bf16.mxu0 0
    %1346 = vmatmul.mubr.bf16.gmra.mrb[0].mxu0 %v1311
    %v1347 = vpop.f32.mrb[0].mxu0
    %v1348 = vadd.f32 %v1296, %v1347
    %v1349 = vpop.f32.mrb[0].mxu0
    %v1350 = vpop.f32.mrb[0].mxu0
    %v1351 = vadd.f32 %v1296, %v1350
    %v1352 = vpop.f32.mrb[0].mxu0
    %1353 = vdwg.mxu0
    %v1354 = vsel %vm71, %v1348, 0.0
    %1355 = vadd.xlane.f32.xlu0 %v1354
    %v1356 = vpop.xlane.xlu0 %1355
    %v1357 = vsel %vm71, %v1351, 0.0
    %1358 = vadd.xlane.f32.xlu0 %v1357
    %v1359 = vpop.xlane.xlu0 %1358
    %v1360 = vmul.f32 %v1356, %v1177
    %v1361 = vmul.f32 %v1359, %v1177
    %v1362 = vsub.f32 %v1348, %v1360
    %v1363 = vsub.f32 %v1351, %v1361
    %v1364 = vmul.f32 %v1362, %v1362
    %v1365 = vmul.f32 %v1363, %v1363
    %v1366 = vsel %vm71, %v1364, 0.0
    %1367 = vadd.xlane.f32.xlu0 %v1366
    %v1368 = vpop.xlane.xlu0 %1367
    %v1369 = vsel %vm71, %v1365, 0.0
    %1370 = vadd.xlane.f32.xlu0 %v1369
    %v1371 = vpop.xlane.xlu0 %1370
    %v1372 = vmul.f32 %v1368, 0.032258064
    %v1373 = vmul.f32 %v1371, 0.032258064
    %v1374 = vrsqrt.pop %v1372
    %v1375 = vmul.f32 %v1372, %v1374
    %vm1376 = vcmp.eq.f32.partialorder %v1372, inf
    %v1377 = vsel %vm1376, %v1372, %v1375
    %vm1378 = vcmp.eq.f32.partialorder %v1372, 0.0
    %v1379 = vand.u32 %v1372, 2147483648
    %v1380 = vsel %vm1378, %v1379, %v1377
    %v1381 = vrsqrt.pop %v1373
    %v1382 = vmul.f32 %v1373, %v1381
    %vm1383 = vcmp.eq.f32.partialorder %v1373, inf
    %v1384 = vsel %vm1383, %v1373, %v1382
    %vm1385 = vcmp.eq.f32.partialorder %v1373, 0.0
    %v1386 = vand.u32 %v1373, 2147483648
    %v1387 = vsel %vm1385, %v1386, %v1384
    %v1388 = vmul.f32 %v1162, %v1362
    %v1389 = vmul.f32 %v1162, %v1363
    %v1390 = vadd.f32 %v1380, 1e-06
    %v1391 = vadd.f32 %v1387, 1e-06
    %v1392 = vrcp.pop %v1390
    %v1393 = vrcp.pop %v1391
    %v1394 = vmul.f32 %v1388, %v1392
    %v1395 = vmul.f32 %v1389, %v1393
    %v1396 = vadd.f32 %v1394, %v1169
    %v1397 = vadd.f32 %v1395, %v1169
    %v1398 = vadd.f32 %v1216, %v1396
    %v1399 = vadd.f32 %v1217, %v1397
    %v1400 = vsel %vm71, %v1398, 0.0
    %1401 = vadd.xlane.f32.xlu0 %v1400
    %v1402 = vpop.xlane.xlu0 %1401
    %v1403 = vsel %vm71, %v1399, 0.0
    %1404 = vadd.xlane.f32.xlu0 %v1403
    %v1405 = vpop.xlane.xlu0 %1404
    %v1406 = vmul.f32 %v1402, %v1177
    %v1407 = vmul.f32 %v1405, %v1177
    %v1408 = vsub.f32 %v1398, %v1406
    %v1409 = vsub.f32 %v1399, %v1407
    %v1410 = vmul.f32 %v1408, %v1408
    %v1411 = vmul.f32 %v1409, %v1409
    %v1412 = vsel %vm71, %v1410, 0.0
    %1413 = vadd.xlane.f32.xlu0 %v1412
    %v1414 = vpop.xlane.xlu0 %1413
    %v1415 = vsel %vm71, %v1411, 0.0
    %1416 = vadd.xlane.f32.xlu0 %v1415
    %v1417 = vpop.xlane.xlu0 %1416
    %v1418 = vmul.f32 %v1414, 0.032258064
    %v1419 = vmul.f32 %v1417, 0.032258064
    %v1420 = vrsqrt.pop %v1418
    %v1421 = vmul.f32 %v1418, %v1420
    %vm1422 = vcmp.eq.f32.partialorder %v1418, inf
    %v1423 = vsel %vm1422, %v1418, %v1421
    %vm1424 = vcmp.eq.f32.partialorder %v1418, 0.0
    %v1425 = vand.u32 %v1418, 2147483648
    %v1426 = vsel %vm1424, %v1425, %v1423
    %v1427 = vrsqrt.pop %v1419
    %v1428 = vmul.f32 %v1419, %v1427
    %vm1429 = vcmp.eq.f32.partialorder %v1419, inf
    %v1430 = vsel %vm1429, %v1419, %v1428
    %vm1431 = vcmp.eq.f32.partialorder %v1419, 0.0
    %v1432 = vand.u32 %v1419, 2147483648
    %v1433 = vsel %vm1431, %v1432, %v1430
    %v1434 = vmul.f32 %v1162, %v1408
    %v1435 = vmul.f32 %v1162, %v1409
    %v1436 = vadd.f32 %v1426, 1e-06
    %v1437 = vadd.f32 %v1433, 1e-06
    %v1438 = vrcp.pop %v1436
    %v1439 = vrcp.pop %v1437
    %v1440 = vmul.f32 %v1434, %v1438
    %v1441 = vmul.f32 %v1435, %v1439
    %v1442 = vadd.f32 %v1440, %v1169
    %v1443 = vadd.f32 %v1441, %v1169
    %1444 = vst.msk [vmem:[#allocation2] sm:$0xff] %vm71, %v1442
    %1445 = vst.msk [vmem:[#allocation2 + $0x8] sm:$0xff] %vm71, %v1443
    // Predicated region
    $region50: #{multi_self_att.1} parent=1 // pred_check
      _
    $region51: #{multi_self_att.1} parent=1 // pred_check_branch
      %1447 = sbr.rel (0) target = $region53
    $region52: #{multi_self_att.1} parent=1 // pred_region
      %s1449 = ssub.s32 256, 256
      %1450 = vsyncadd [#allocation3], %s1449
      %s1451 = sshll.u32 [#allocation2], 4
      %s1452 = int_to_ptr.vmem [resolvable:$true] %s1451
      %1457 = dma.vmem_to_hbm [thread:$0]  %s1452, 256, %s12, [#allocation3], 128, 128, 8
    $region53: #{multi_self_att.1} parent=1 // pred_fallthru
      _
    // Predicated region
    $region54: #{multi_self_att.1} parent=1 // pred_check
      _
    $region55: #{multi_self_att.1} parent=1 // pred_check_branch
      %1459 = sbr.rel (0) target = $region57
    $region56: #{multi_self_att.1} parent=1 // pred_region
      %1460 = dma.done [#allocation3], 256
    $region57: #{multi_self_att.1} parent=1 // pred_fallthru
      _
    %1461 = vsyncpa [#allocation3], 1

</llo_original>
